<compile_context>
chip_gen: v7x
topology: tpu7x:2x2x1
jax: 0.10.0
libtpu: 0.0.40
codegen_flags: <defaults>
</compile_context>

<pallas_src>
import math
import functools

import jax
import jax.numpy as jnp
from jax.experimental import pallas as pl
from jax.experimental.pallas import tpu as pltpu

LANE = 128


# ----------------------------- planning helpers ---------------------------- #

def _round_up(x, m):
    return ((x + m - 1) // m) * m


def _pad2(a, rows, cols):
    return jnp.pad(a, ((0, rows - a.shape[0]), (0, cols - a.shape[1])))


def _vmem_budget_bytes():
    # Generation-aware scoped-VMEM budget: ~70% of physical VMEM
    # (v5e/v6e: 128 MiB -> ~89 MiB; v7x: 64 MiB -> ~44 MiB). Safe fallback 48 MiB.
    try:
        cap = int(pltpu.get_tpu_info().vmem_capacity_bytes)
        if cap > 0:
            return int(cap * 0.7)
    except Exception:
        pass
    return 48 * 1024 * 1024


def _plan_gcn(npad, hpad, budget):
    """Pick (row tile, K tile, h_resident) for the tiled GCN layer."""
    h_res_bytes = 2 * npad * hpad * 2          # resident bf16 h (assume 2 buffers worst case)
    h_resident = h_res_bytes <= budget // 2

    cands = [t for t in (1024, 512, 256, 128) if npad % t == 0] or [npad]

    def need(t):
        b = (2 * t * t * 2        # adj tile bf16, double-buffered
             + 2 * t * hpad * 4   # h0 tile f32, double-buffered
             + hpad * hpad * 4    # W_eff (constant index -> resident)
             + 2 * t * hpad * 2   # bf16 output tile, double-buffered
             + t * hpad * 4)      # f32 accumulator scratch
        b += h_res_bytes if h_resident else 2 * t * hpad * 2
        return b

    tm = tk = cands[-1]
    for t in cands:               # largest first
        if need(t) <= budget:
            tm = tk = t
            break

    # v7x megacore: guarantee >= 2 tiles on the "parallel" row axis.
    if npad // tm == 1 and (npad // 2) % 8 == 0 and npad // 2 > 0:
        tm = npad // 2
    return tm, tk, h_resident


def _fused_fits(npad, hpad, nlayers, budget):
    need = (npad * npad * 2        # adj (bf16, resident)
            + npad * hpad * 2      # h_in (bf16)
            + npad * hpad * 4      # h0 (f32)
            + 2 * hpad * hpad * 4  # W_eff block (double-buffered over layer axis)
            + npad * hpad * 2      # bf16 output
            + npad * hpad * 2      # h_cur scratch (bf16)
            + 3 * npad * hpad * 4) # slop for hi / support f32 temporaries
    return nlayers >= 1 and need <= budget


# ----------------------------- kernels ------------------------------------ #

def _linear_relu_kernel(x_ref, w_ref, b_ref, o32_ref, o16_ref):
    # h = relu(x @ W + b) for one row tile; emit both f32 (h0) and bf16 (h).
    y = jnp.dot(x_ref[...], w_ref[...], preferred_element_type=jnp.float32)
    h = jnp.maximum(y + b_ref[...], 0.0)
    o32_ref[...] = h
    o16_ref[...] = h.astype(o16_ref.dtype)


def _gcn_layer_kernel(adj_ref, h_ref, h0_ref, w_ref, o_ref, acc_ref, *,
                      alpha, tk, h_resident):
    # GraphConvolution (variant=False, residual=False) fused with ReLU:
    #   hi      = adj @ h                  (accumulated over the K grid axis)
    #   support = (1-alpha)*hi + alpha*h0
    #   out     = relu(support @ W_eff)    with W_eff = theta*W + (1-theta)*I
    k = pl.program_id(1)

    @pl.when(k == 0)
    def _():
        acc_ref[...] = jnp.zeros_like(acc_ref)

    if h_resident:
        off = pl.multiple_of(k * tk, tk)
        h_blk = h_ref[pl.ds(off, tk), :]          # slice VMEM-resident h
    else:
        h_blk = h_ref[...]                        # streamed (tk, hpad) tile

    acc_ref[...] += jnp.dot(adj_ref[...], h_blk,
                            preferred_element_type=jnp.float32)

    @pl.when(k == pl.num_programs(1) - 1)
    def _():
        support = (1.0 - alpha) * acc_ref[...] + alpha * h0_ref[...]
        out = jnp.dot(support, w_ref[...], preferred_element_type=jnp.float32)
        o_ref[...] = jnp.maximum(out, 0.0).astype(o_ref.dtype)


def _gcn_fused_kernel(adj_ref, hin_ref, h0_ref, w_ref, o_ref, hcur_ref, *, alpha):
    # All GCN layers in one pallas_call; adj / h0 / h stay VMEM-resident,
    # grid axis 0 iterates over layers ("arbitrary" / sequential).
    l = pl.program_id(0)

    @pl.when(l == 0)
    def _():
        hcur_ref[...] = hin_ref[...]

    hi = jnp.dot(adj_ref[...], hcur_ref[...], preferred_element_type=jnp.float32)
    support = (1.0 - alpha) * hi + alpha * h0_ref[...]
    out = jnp.dot(support, w_ref[...], preferred_element_type=jnp.float32)
    hcur_ref[...] = jnp.maximum(out, 0.0).astype(hcur_ref.dtype)

    @pl.when(l == pl.num_programs(0) - 1)
    def _():
        o_ref[...] = hcur_ref[...]


def _linear_logsoftmax_kernel(x_ref, w_ref, b_ref, o_ref, *, nclass):
    # o = log_softmax(x @ W + b) over the real (unpadded) class columns.
    x = x_ref[...].astype(jnp.float32)             # exact upcast of bf16 h
    y = jnp.dot(x, w_ref[...], preferred_element_type=jnp.float32) + b_ref[...]
    col = jax.lax.broadcasted_iota(jnp.int32, y.shape, 1)
    y = jnp.where(col < nclass, y, -1e30)           # mask padded classes before reduce
    m = jnp.max(y, axis=1, keepdims=True)
    z = y - m
    lse = jnp.log(jnp.sum(jnp.exp(z), axis=1, keepdims=True))
    o_ref[...] = z - lse


# ----------------------------- wrappers ------------------------------------ #

def linear_relu(x, w, b, *, tile, vmem_limit):
    npad, fpad = x.shape
    hpad = w.shape[1]
    # TODO(synk): tile the K (nfeat) axis too if fpad becomes very large.
    return pl.pallas_call(
        _linear_relu_kernel,
        out_shape=(jax.ShapeDtypeStruct((npad, hpad), jnp.float32),
                   jax.ShapeDtypeStruct((npad, hpad), jnp.bfloat16)),
        grid=(npad // tile,),
        in_specs=[
            pl.BlockSpec((tile, fpad), lambda i: (i, 0)),    # x (bf16)
            pl.BlockSpec((fpad, hpad), lambda i: (0, 0)),    # W (bf16, resident)
            pl.BlockSpec((1, hpad), lambda i: (0, 0)),       # b (f32)
        ],
        out_specs=(pl.BlockSpec((tile, hpad), lambda i: (i, 0)),
                   pl.BlockSpec((tile, hpad), lambda i: (i, 0))),
        compiler_params=pltpu.CompilerParams(
            dimension_semantics=("parallel",),
            vmem_limit_bytes=vmem_limit),
    )(x, w, b)


def gcn_layer(adj, h, h0, w_eff, *, alpha, tm, tk, h_resident, vmem_limit):
    npad = adj.shape[0]
    hpad = h.shape[1]
    kern = functools.partial(_gcn_layer_kernel, alpha=float(alpha),
                             tk=int(tk), h_resident=bool(h_resident))
    if h_resident:
        # Full-extent block, constant index map -> DMA'd into VMEM once per layer
        # and reused across every row tile (no re-streaming of h).
        h_spec = pl.BlockSpec((npad, hpad), lambda i, k: (0, 0))
    else:
        h_spec = pl.BlockSpec((tk, hpad), lambda i, k: (k, 0))
    return pl.pallas_call(
        kern,
        out_shape=jax.ShapeDtypeStruct((npad, hpad), jnp.bfloat16),
        grid=(npad // tm, npad // tk),               # (row tiles, adj-K tiles)
        in_specs=[
            pl.BlockSpec((tm, tk), lambda i, k: (i, k)),     # adj tile (bf16)
            h_spec,                                          # h (bf16)
            pl.BlockSpec((tm, hpad), lambda i, k: (i, 0)),   # h0 rows (f32)
            pl.BlockSpec((hpad, hpad), lambda i, k: (0, 0)), # W_eff (f32, resident)
        ],
        out_specs=pl.BlockSpec((tm, hpad), lambda i, k: (i, 0)),
        scratch_shapes=[pltpu.VMEM((tm, hpad), jnp.float32)],
        compiler_params=pltpu.CompilerParams(
            dimension_semantics=("parallel", "arbitrary"),
            vmem_limit_bytes=vmem_limit),
    )(adj, h, h0, w_eff)


def gcn_fused(adj, h_in, h0, w_stack, *, alpha, vmem_limit):
    npad = adj.shape[0]
    hpad = h_in.shape[1]
    nlayers = w_stack.shape[0]
    kern = functools.partial(_gcn_fused_kernel, alpha=float(alpha))
    return pl.pallas_call(
        kern,
        out_shape=jax.ShapeDtypeStruct((npad, hpad), jnp.bfloat16),
        grid=(nlayers,),
        in_specs=[
            pl.BlockSpec((npad, npad), lambda l: (0, 0)),        # adj resident (bf16)
            pl.BlockSpec((npad, hpad), lambda l: (0, 0)),        # h_in resident (bf16)
            pl.BlockSpec((npad, hpad), lambda l: (0, 0)),        # h0 resident (f32)
            pl.BlockSpec((None, hpad, hpad), lambda l: (l, 0, 0)),  # W_eff for layer l (f32)
        ],
        out_specs=pl.BlockSpec((npad, hpad), lambda l: (0, 0)),
        scratch_shapes=[pltpu.VMEM((npad, hpad), jnp.bfloat16)],
        compiler_params=pltpu.CompilerParams(
            dimension_semantics=("arbitrary",),
            vmem_limit_bytes=vmem_limit),
    )(adj, h_in, h0, w_stack)


def linear_logsoftmax(x, w, b, *, nclass, tile, vmem_limit):
    npad, hpad = x.shape
    cpad = w.shape[1]
    kern = functools.partial(_linear_logsoftmax_kernel, nclass=int(nclass))
    return pl.pallas_call(
        kern,
        out_shape=jax.ShapeDtypeStruct((npad, cpad), jnp.float32),
        grid=(npad // tile,),
        in_specs=[
            pl.BlockSpec((tile, hpad), lambda i: (i, 0)),    # h (bf16)
            pl.BlockSpec((hpad, cpad), lambda i: (0, 0)),    # W (f32, resident)
            pl.BlockSpec((1, cpad), lambda i: (0, 0)),       # b (f32)
        ],
        out_specs=pl.BlockSpec((tile, cpad), lambda i: (i, 0)),
        compiler_params=pltpu.CompilerParams(
            dimension_semantics=("parallel",),
            vmem_limit_bytes=vmem_limit),
    )(x, w, b)


# ----------------------------- GCNII forward ------------------------------- #

def gcnii_forward(x, adj, params, *, lamda, alpha, nclass,
                  adj_dtype=jnp.bfloat16, force_tiled=False):
    """Inference path of GCNII (dropout is identity in eval mode)."""
    n, nfeat = x.shape
    nhidden = params["fc0_w"].shape[1]
    nlayers = len(params["conv_ws"])

    npad = _round_up(n, LANE)
    fpad = _round_up(nfeat, LANE)
    hpad = _round_up(nhidden, LANE)
    cpad = _round_up(nclass, LANE)

    budget = _vmem_budget_bytes()
    tm, tk, h_resident = _plan_gcn(npad, hpad, budget)

    # Zero-pad to lane/sublane friendly shapes. Padded hidden/feature columns stay
    # exactly zero through the whole pipeline; padded rows are sliced off at the end.
    xp = _pad2(x, npad, fpad).astype(jnp.bfloat16)             # bf16 fc0 stream
    adjp = _pad2(adj, npad, npad).astype(adj_dtype)            # bf16 adj: half the HBM bytes
    fc0_w = _pad2(params["fc0_w"], fpad, hpad).astype(jnp.bfloat16)
    fc0_b = jnp.pad(params["fc0_b"], (0, hpad - nhidden)).reshape(1, hpad)
    fc1_w = _pad2(params["fc1_w"], hpad, cpad)
    fc1_b = jnp.pad(params["fc1_b"], (0, cpad - nclass)).reshape(1, cpad)

    # fc0: one pass emits both the f32 h0 and the bf16 h (no extra astype pass).
    h0_f32, h_bf16 = linear_relu(xp, fc0_w, fc0_b, tile=tm, vmem_limit=budget)

    if nlayers > 0:
        eye = jnp.eye(hpad, dtype=jnp.float32)
        # Fold theta into the weight once: theta*(s@W) + (1-theta)*s == s @ W_eff.
        w_effs = []
        for i, w in enumerate(params["conv_ws"]):
            theta = math.log(lamda / (i + 1) + 1.0)
            w_effs.append(theta * _pad2(w, hpad, hpad) + (1.0 - theta) * eye)

        if (not force_tiled) and _fused_fits(npad, hpad, nlayers, budget):
            # adj fits VMEM: stream it from HBM once for all layers.
            w_stack = jnp.stack(w_effs)                       # (L, hpad, hpad)
            h_bf16 = gcn_fused(adjp, h_bf16, h0_f32, w_stack,
                               alpha=alpha, vmem_limit=budget)
        else:
            for w_eff in w_effs:
                h_bf16 = gcn_layer(adjp, h_bf16, h0_f32, w_eff, alpha=alpha,
                                   tm=tm, tk=tk, h_resident=h_resident,
                                   vmem_limit=budget)

    out = linear_logsoftmax(h_bf16, fc1_w, fc1_b, nclass=nclass, tile=tm,
                            vmem_limit=budget)
    return out[:n, :nclass]


# ----------------------------- references ---------------------------------- #

def gcnii_reference_matched(x, adj, params, *, lamda, alpha):
    """Pure-JAX reference matching the kernel's precision choices
    (bf16 matmul inputs, f32 accumulation, bf16 h between layers)."""
    xb = x.astype(jnp.bfloat16)
    w0 = params["fc0_w"].astype(jnp.bfloat16)
    h0 = jnp.maximum(
        jnp.dot(xb, w0, preferred_element_type=jnp.float32) + params["fc0_b"], 0.0)
    h = h0.astype(jnp.bfloat16)
    adj_b = adj.astype(jnp.bfloat16)
    nhidden = params["fc0_w"].shape[1]
    eye = jnp.eye(nhidden, dtype=jnp.float32)
    for i, w in enumerate(params["conv_ws"]):
        theta = math.log(lamda / (i + 1) + 1.0)
        w_eff = theta * w + (1.0 - theta) * eye
        hi = jnp.dot(adj_b, h, preferred_element_type=jnp.float32)
        support = (1.0 - alpha) * hi + alpha * h0
        h = jnp.maximum(support @ w_eff, 0.0).astype(jnp.bfloat16)
    y = h.astype(jnp.float32) @ params["fc1_w"] + params["fc1_b"]
    return jax.nn.log_softmax(y, axis=1)


def gcnii_reference_f32(x, adj, params, *, lamda, alpha):
    """Full-f32 module semantics (GCNII forward, eval mode, test != 0)."""
    h = jnp.maximum(x @ params["fc0_w"] + params["fc0_b"], 0.0)
    h0 = h
    for i, w in enumerate(params["conv_ws"]):
        theta = math.log(lamda / (i + 1) + 1.0)
        hi = adj @ h
        support = (1.0 - alpha) * hi + alpha * h0
        h = jnp.maximum(theta * (support @ w) + (1.0 - theta) * support, 0.0)
    y = h @ params["fc1_w"] + params["fc1_b"]
    return jax.nn.log_softmax(y, axis=1)


# ----------------------------- parameter init ------------------------------ #

def init_params(key, nfeat, nhidden, nclass, nlayers):
    keys = jax.random.split(key, 4 + nlayers)
    fc0_bound = 1.0 / math.sqrt(nfeat)
    fc1_bound = 1.0 / math.sqrt(nhidden)
    fc0_w = jax.random.uniform(keys[0], (nfeat, nhidden), jnp.float32, -fc0_bound, fc0_bound)
    fc0_b = jax.random.uniform(keys[1], (nhidden,), jnp.float32, -fc0_bound, fc0_bound)
    fc1_w = jax.random.uniform(keys[2], (nhidden, nclass), jnp.float32, -fc1_bound, fc1_bound)
    fc1_b = jax.random.uniform(keys[3], (nclass,), jnp.float32, -fc1_bound, fc1_bound)
    stdv = 1.0 / math.sqrt(nhidden)  # GraphConvolution init
    conv_ws = [
        jax.random.uniform(keys[4 + i], (nhidden, nhidden), jnp.float32, -stdv, stdv)
        for i in range(nlayers)
    ]
    return {"fc0_w": fc0_w, "fc0_b": fc0_b, "fc1_w": fc1_w, "fc1_b": fc1_b,
            "conv_ws": conv_ws}


# ----------------------------- main ---------------------------------------- #

if __name__ == "__main__":
    N, NFEAT, NHIDDEN, NCLASS, NLAYERS = 16, 12, 32, 4, 2
    LAMDA, ALPHA = 0.5, 0.1

    key = jax.random.PRNGKey(0)
    k_x, k_adj, k_params = jax.random.split(key, 3)

    # node features
    x = jax.random.normal(k_x, (N, NFEAT), jnp.float32)

    # deterministic symmetric normalized adjacency with self-loops:
    # A_hat = D^{-1/2} (A + I) D^{-1/2}
    a = (jax.random.uniform(k_adj, (N, N)) > 0.7).astype(jnp.float32)
    a = jnp.maximum(a, a.T)
    a = a + jnp.eye(N, dtype=jnp.float32)
    deg = jnp.sum(a, axis=1)
    d_inv_sqrt = 1.0 / jnp.sqrt(deg)
    adj = a * d_inv_sqrt[:, None] * d_inv_sqrt[None, :]

    params = init_params(k_params, NFEAT, NHIDDEN, NCLASS, NLAYERS)

    fwd_auto = jax.jit(functools.partial(
        gcnii_forward, lamda=LAMDA, alpha=ALPHA, nclass=NCLASS))
    fwd_tiled = jax.jit(functools.partial(
        gcnii_forward, lamda=LAMDA, alpha=ALPHA, nclass=NCLASS, force_tiled=True))

    out_auto = jax.block_until_ready(fwd_auto(x, adj, params))    # fused path (small graph)
    out_tiled = jax.block_until_ready(fwd_tiled(x, adj, params))  # tiled path
    assert out_auto.shape == (N, NCLASS)
    assert out_tiled.shape == (N, NCLASS)

    # Tight check against a reference matching the kernel's precision choices.
    ref_m = gcnii_reference_matched(x, adj, params, lamda=LAMDA, alpha=ALPHA)
    assert jnp.allclose(out_auto, ref_m, atol=1e-2, rtol=1e-2), \
        "fused path mismatch vs matched-precision JAX reference"
    assert jnp.allclose(out_tiled, ref_m, atol=1e-2, rtol=1e-2), \
        "tiled path mismatch vs matched-precision JAX reference"
    assert jnp.allclose(out_auto, out_tiled, atol=1e-2, rtol=1e-2), \
        "fused vs tiled path mismatch"

    # Sanity check against the full-f32 module semantics (loose: bounds bf16 drift).
    ref_f32 = gcnii_reference_f32(x, adj, params, lamda=LAMDA, alpha=ALPHA)
    assert jnp.allclose(out_auto, ref_f32, atol=1e-1, rtol=1e-1), \
        "mismatch vs full-precision JAX reference"

    print("KERNEL_OK")
</pallas_src>

<mosaic_0001>
module attributes {stable_mosaic.version = 11 : i64} {
  func.func @_linear_relu_kernel(%arg0: i32, %arg1: memref<64x128xbf16, #tpu.memory_space<vmem>>, %arg2: memref<128x128xbf16, #tpu.memory_space<vmem>>, %arg3: memref<1x128xf32, #tpu.memory_space<vmem>>, %arg4: memref<64x128xf32, #tpu.memory_space<vmem>>, %arg5: memref<64x128xbf16, #tpu.memory_space<vmem>>) attributes {dimension_semantics = [#tpu.dimension_semantics<parallel>], iteration_bounds = array<i64: 2>, scalar_prefetch = 0 : i64, scratch_operands = 0 : i64, tpu.core_type = #tpu.core_type<tc>, window_params = [{transform_indices = @transform_0, window_bounds = array<i64: 64, 128>}, {pipeline_mode = #tpu.pipeline_mode<synchronous>, transform_indices = @transform_1, window_bounds = array<i64: 128, 128>}, {pipeline_mode = #tpu.pipeline_mode<synchronous>, transform_indices = @transform_2, window_bounds = array<i64: 1, 128>}, {transform_indices = @transform_3, window_bounds = array<i64: 64, 128>}, {transform_indices = @transform_4, window_bounds = array<i64: 64, 128>}]} {
    %c0 = arith.constant 0 : index
    %c0_0 = arith.constant 0 : index
    %0 = vector.load %arg1[%c0, %c0_0] : memref<64x128xbf16, #tpu.memory_space<vmem>>, vector<64x128xbf16>
    %c0_1 = arith.constant 0 : index
    %c0_2 = arith.constant 0 : index
    %1 = vector.load %arg2[%c0_1, %c0_2] : memref<128x128xbf16, #tpu.memory_space<vmem>>, vector<128x128xbf16>
    %cst = arith.constant dense<0.000000e+00> : vector<64x128xf32>
    %2 = tpu.matmul %0, %1, %cst {dimension_numbers = #tpu.dot_dimension_numbers<[1], [0], [0], [1], [0, 0, 1, 1], [], []>} : vector<64x128xbf16>, vector<128x128xbf16>, vector<64x128xf32> -> vector<64x128xf32>
    %c0_3 = arith.constant 0 : index
    %c0_4 = arith.constant 0 : index
    %3 = vector.load %arg3[%c0_3, %c0_4] : memref<1x128xf32, #tpu.memory_space<vmem>>, vector<1x128xf32>
    %4 = vector.broadcast %3 : vector<1x128xf32> to vector<64x128xf32>
    %5 = arith.addf %2, %4 : vector<64x128xf32>
    %cst_5 = arith.constant 0.000000e+00 : f32
    %6 = vector.broadcast %cst_5 : f32 to vector<64x128xf32>
    %7 = arith.maximumf %5, %6 : vector<64x128xf32>
    %c0_6 = arith.constant 0 : index
    %c0_7 = arith.constant 0 : index
    %8 = vector.load %arg4[%c0_6, %c0_7] : memref<64x128xf32, #tpu.memory_space<vmem>>, vector<64x128xf32>
    tpu.vector_store %arg4[%c0_6, %c0_7], %7 {strides = array<i32>} : memref<64x128xf32, #tpu.memory_space<vmem>>, vector<64x128xf32>,
    %9 = arith.truncf %7 : vector<64x128xf32> to vector<64x128xbf16>
    %c0_8 = arith.constant 0 : index
    %c0_9 = arith.constant 0 : index
    %10 = vector.load %arg5[%c0_8, %c0_9] : memref<64x128xbf16, #tpu.memory_space<vmem>>, vector<64x128xbf16>
    tpu.vector_store %arg5[%c0_8, %c0_9], %9 {strides = array<i32>} : memref<64x128xbf16, #tpu.memory_space<vmem>>, vector<64x128xbf16>,
    return
  }
  func.func @transform_0(%arg0: i32) -> (i32, i32) {
    %c0_i32 = arith.constant 0 : i32
    %c0_i32_0 = arith.constant 0 : i32
    return %arg0, %c0_i32 : i32, i32
  }
  func.func @transform_1(%arg0: i32) -> (i32, i32) {
    %c0_i32 = arith.constant 0 : i32
    %c0_i32_0 = arith.constant 0 : i32
    %c0_i32_1 = arith.constant 0 : i32
    return %c0_i32, %c0_i32_0 : i32, i32
  }
  func.func @transform_2(%arg0: i32) -> (i32, i32) {
    %c0_i32 = arith.constant 0 : i32
    %c0_i32_0 = arith.constant 0 : i32
    %c0_i32_1 = arith.constant 0 : i32
    return %c0_i32, %c0_i32_0 : i32, i32
  }
  func.func @transform_3(%arg0: i32) -> (i32, i32) {
    %c0_i32 = arith.constant 0 : i32
    %c0_i32_0 = arith.constant 0 : i32
    return %arg0, %c0_i32 : i32, i32
  }
  func.func @transform_4(%arg0: i32) -> (i32, i32) {
    %c0_i32 = arith.constant 0 : i32
    %c0_i32_0 = arith.constant 0 : i32
    return %arg0, %c0_i32 : i32, i32
  }
}

module attributes {stable_mosaic.version = 11 : i64} {
  func.func @_linear_logsoftmax_kernel(%arg0: i32, %arg1: memref<64x128xbf16, #tpu.memory_space<vmem>>, %arg2: memref<128x128xf32, #tpu.memory_space<vmem>>, %arg3: memref<1x128xf32, #tpu.memory_space<vmem>>, %arg4: memref<64x128xf32, #tpu.memory_space<vmem>>) attributes {dimension_semantics = [#tpu.dimension_semantics<parallel>], iteration_bounds = array<i64: 2>, scalar_prefetch = 0 : i64, scratch_operands = 0 : i64, tpu.core_type = #tpu.core_type<tc>, window_params = [{transform_indices = @transform_0, window_bounds = array<i64: 64, 128>}, {pipeline_mode = #tpu.pipeline_mode<synchronous>, transform_indices = @transform_1, window_bounds = array<i64: 128, 128>}, {pipeline_mode = #tpu.pipeline_mode<synchronous>, transform_indices = @transform_2, window_bounds = array<i64: 1, 128>}, {transform_indices = @transform_3, window_bounds = array<i64: 64, 128>}]} {
    %c0 = arith.constant 0 : index
    %c0_0 = arith.constant 0 : index
    %0 = vector.load %arg1[%c0, %c0_0] : memref<64x128xbf16, #tpu.memory_space<vmem>>, vector<64x128xbf16>
    %1 = arith.extf %0 : vector<64x128xbf16> to vector<64x128xf32>
    %c0_1 = arith.constant 0 : index
    %c0_2 = arith.constant 0 : index
    %2 = vector.load %arg2[%c0_1, %c0_2] : memref<128x128xf32, #tpu.memory_space<vmem>>, vector<128x128xf32>
    %cst = arith.constant dense<0.000000e+00> : vector<64x128xf32>
    %3 = tpu.matmul %1, %2, %cst {dimension_numbers = #tpu.dot_dimension_numbers<[1], [0], [0], [1], [0, 0, 1, 1], [], []>} : vector<64x128xf32>, vector<128x128xf32>, vector<64x128xf32> -> vector<64x128xf32>
    %c0_3 = arith.constant 0 : index
    %c0_4 = arith.constant 0 : index
    %4 = vector.load %arg3[%c0_3, %c0_4] : memref<1x128xf32, #tpu.memory_space<vmem>>, vector<1x128xf32>
    %5 = vector.broadcast %4 : vector<1x128xf32> to vector<64x128xf32>
    %6 = arith.addf %3, %5 : vector<64x128xf32>
    %7 = tpu.iota {dimensions = array<i32: 1>} : vector<64x128xi32>
    %c4_i32 = arith.constant 4 : i32
    %8 = vector.broadcast %c4_i32 : i32 to vector<64x128xi32>
    %9 = arith.cmpi slt, %7, %8 : vector<64x128xi32>
    %cst_5 = arith.constant -1.000000e+30 : f32
    %10 = vector.broadcast %cst_5 : f32 to vector<64x128xf32>
    %11 = arith.select %9, %6, %10 : vector<64x128xi1>, vector<64x128xf32>
    %cst_6 = arith.constant dense<0xFF800000> : vector<64xf32>
    %12 = vector.multi_reduction <maximumf>, %11, %cst_6 [1] : vector<64x128xf32> to vector<64xf32>
    %13 = vector.shape_cast %12 : vector<64xf32> to vector<64x1xf32>
    %14 = vector.broadcast %13 : vector<64x1xf32> to vector<64x128xf32>
    %15 = arith.subf %11, %14 : vector<64x128xf32>
    %16 = math.exp %15 : vector<64x128xf32>
    %cst_7 = arith.constant dense<0.000000e+00> : vector<64xf32>
    %17 = vector.multi_reduction <add>, %16, %cst_7 [1] : vector<64x128xf32> to vector<64xf32>
    %18 = vector.shape_cast %17 : vector<64xf32> to vector<64x1xf32>
    %19 = math.log %18 : vector<64x1xf32>
    %20 = vector.broadcast %19 : vector<64x1xf32> to vector<64x128xf32>
    %21 = arith.subf %15, %20 : vector<64x128xf32>
    %c0_8 = arith.constant 0 : index
    %c0_9 = arith.constant 0 : index
    %22 = vector.load %arg4[%c0_8, %c0_9] : memref<64x128xf32, #tpu.memory_space<vmem>>, vector<64x128xf32>
    tpu.vector_store %arg4[%c0_8, %c0_9], %21 {strides = array<i32>} : memref<64x128xf32, #tpu.memory_space<vmem>>, vector<64x128xf32>,
    return
  }
  func.func @transform_0(%arg0: i32) -> (i32, i32) {
    %c0_i32 = arith.constant 0 : i32
    %c0_i32_0 = arith.constant 0 : i32
    return %arg0, %c0_i32 : i32, i32
  }
  func.func @transform_1(%arg0: i32) -> (i32, i32) {
    %c0_i32 = arith.constant 0 : i32
    %c0_i32_0 = arith.constant 0 : i32
    %c0_i32_1 = arith.constant 0 : i32
    return %c0_i32, %c0_i32_0 : i32, i32
  }
  func.func @transform_2(%arg0: i32) -> (i32, i32) {
    %c0_i32 = arith.constant 0 : i32
    %c0_i32_0 = arith.constant 0 : i32
    %c0_i32_1 = arith.constant 0 : i32
    return %c0_i32, %c0_i32_0 : i32, i32
  }
  func.func @transform_3(%arg0: i32) -> (i32, i32) {
    %c0_i32 = arith.constant 0 : i32
    %c0_i32_0 = arith.constant 0 : i32
    return %arg0, %c0_i32 : i32, i32
  }
}

module attributes {stable_mosaic.version = 11 : i64} {
  func.func @_gcn_fused_kernel(%arg0: i32, %arg1: memref<128x128xbf16, #tpu.memory_space<vmem>>, %arg2: memref<128x128xbf16, #tpu.memory_space<vmem>>, %arg3: memref<128x128xf32, #tpu.memory_space<vmem>>, %arg4: memref<1x128x128xf32, #tpu.memory_space<vmem>>, %arg5: memref<128x128xbf16, #tpu.memory_space<vmem>>, %arg6: memref<128x128xbf16, #tpu.memory_space<vmem>>) attributes {dimension_semantics = [#tpu.dimension_semantics<arbitrary>], iteration_bounds = array<i64: 2>, scalar_prefetch = 0 : i64, scratch_operands = 1 : i64, tpu.core_type = #tpu.core_type<tc>, window_params = [{pipeline_mode = #tpu.pipeline_mode<synchronous>, transform_indices = @transform_0, window_bounds = array<i64: 128, 128>}, {pipeline_mode = #tpu.pipeline_mode<synchronous>, transform_indices = @transform_1, window_bounds = array<i64: 128, 128>}, {pipeline_mode = #tpu.pipeline_mode<synchronous>, transform_indices = @transform_2, window_bounds = array<i64: 128, 128>}, {transform_indices = @transform_3, window_bounds = array<i64: 1, 128, 128>}, {pipeline_mode = #tpu.pipeline_mode<synchronous>, transform_indices = @transform_4, window_bounds = array<i64: 128, 128>}]} {
    %c0_i32 = arith.constant 0 : i32
    %0 = arith.cmpi eq, %arg0, %c0_i32 : i32
    %1 = arith.extui %0 : i1 to i32
    %c0_i32_0 = arith.constant 0 : i32
    %2 = arith.cmpi ne, %1, %c0_i32_0 : i32
    scf.if %2 {
      %c0_16 = arith.constant 0 : index
      %c0_17 = arith.constant 0 : index
      %22 = vector.load %arg2[%c0_16, %c0_17] : memref<128x128xbf16, #tpu.memory_space<vmem>>, vector<128x128xbf16>
      %c0_18 = arith.constant 0 : index
      %c0_19 = arith.constant 0 : index
      %23 = vector.load %arg6[%c0_18, %c0_19] : memref<128x128xbf16, #tpu.memory_space<vmem>>, vector<128x128xbf16>
      tpu.vector_store %arg6[%c0_18, %c0_19], %22 {strides = array<i32>} : memref<128x128xbf16, #tpu.memory_space<vmem>>, vector<128x128xbf16>,
    } else {
    }
    %c0 = arith.constant 0 : index
    %c0_1 = arith.constant 0 : index
    %3 = vector.load %arg1[%c0, %c0_1] : memref<128x128xbf16, #tpu.memory_space<vmem>>, vector<128x128xbf16>
    %c0_2 = arith.constant 0 : index
    %c0_3 = arith.constant 0 : index
    %4 = vector.load %arg6[%c0_2, %c0_3] : memref<128x128xbf16, #tpu.memory_space<vmem>>, vector<128x128xbf16>
    %cst = arith.constant dense<0.000000e+00> : vector<128x128xf32>
    %5 = tpu.matmul %3, %4, %cst {dimension_numbers = #tpu.dot_dimension_numbers<[1], [0], [0], [1], [0, 0, 1, 1], [], []>} : vector<128x128xbf16>, vector<128x128xbf16>, vector<128x128xf32> -> vector<128x128xf32>
    %cst_4 = arith.constant 0.899999976 : f32
    %6 = vector.broadcast %cst_4 : f32 to vector<128x128xf32>
    %7 = arith.mulf %6, %5 : vector<128x128xf32>
    %c0_5 = arith.constant 0 : index
    %c0_6 = arith.constant 0 : index
    %8 = vector.load %arg3[%c0_5, %c0_6] : memref<128x128xf32, #tpu.memory_space<vmem>>, vector<128x128xf32>
    %cst_7 = arith.constant 1.000000e-01 : f32
    %9 = vector.broadcast %cst_7 : f32 to vector<128x128xf32>
    %10 = arith.mulf %9, %8 : vector<128x128xf32>
    %11 = arith.addf %7, %10 : vector<128x128xf32>
    %c0_8 = arith.constant 0 : index
    %c0_9 = arith.constant 0 : index
    %c0_10 = arith.constant 0 : index
    %12 = vector.load %arg4[%c0_8, %c0_9, %c0_10] : memref<1x128x128xf32, #tpu.memory_space<vmem>>, vector<1x128x128xf32>
    %13 = vector.shape_cast %12 : vector<1x128x128xf32> to vector<128x128xf32>
    %cst_11 = arith.constant dense<0.000000e+00> : vector<128x128xf32>
    %14 = tpu.matmul %11, %13, %cst_11 {dimension_numbers = #tpu.dot_dimension_numbers<[1], [0], [0], [1], [0, 0, 1, 1], [], []>} : vector<128x128xf32>, vector<128x128xf32>, vector<128x128xf32> -> vector<128x128xf32>
    %cst_12 = arith.constant 0.000000e+00 : f32
    %15 = vector.broadcast %cst_12 : f32 to vector<128x128xf32>
    %16 = arith.maximumf %14, %15 : vector<128x128xf32>
    %17 = arith.truncf %16 : vector<128x128xf32> to vector<128x128xbf16>
    %c0_13 = arith.constant 0 : index
    %c0_14 = arith.constant 0 : index
    %18 = vector.load %arg6[%c0_13, %c0_14] : memref<128x128xbf16, #tpu.memory_space<vmem>>, vector<128x128xbf16>
    tpu.vector_store %arg6[%c0_13, %c0_14], %17 {strides = array<i32>} : memref<128x128xbf16, #tpu.memory_space<vmem>>, vector<128x128xbf16>,
    %c1_i32 = arith.constant 1 : i32
    %19 = arith.cmpi eq, %arg0, %c1_i32 : i32
    %20 = arith.extui %19 : i1 to i32
    %c0_i32_15 = arith.constant 0 : i32
    %21 = arith.cmpi ne, %20, %c0_i32_15 : i32
    scf.if %21 {
      %c0_16 = arith.constant 0 : index
      %c0_17 = arith.constant 0 : index
      %22 = vector.load %arg6[%c0_16, %c0_17] : memref<128x128xbf16, #tpu.memory_space<vmem>>, vector<128x128xbf16>
      %c0_18 = arith.constant 0 : index
      %c0_19 = arith.constant 0 : index
      %23 = vector.load %arg5[%c0_18, %c0_19] : memref<128x128xbf16, #tpu.memory_space<vmem>>, vector<128x128xbf16>
      tpu.vector_store %arg5[%c0_18, %c0_19], %22 {strides = array<i32>} : memref<128x128xbf16, #tpu.memory_space<vmem>>, vector<128x128xbf16>,
    } else {
    }
    return
  }
  func.func @transform_0(%arg0: i32) -> (i32, i32) {
    %c0_i32 = arith.constant 0 : i32
    %c0_i32_0 = arith.constant 0 : i32
    %c0_i32_1 = arith.constant 0 : i32
    return %c0_i32, %c0_i32_0 : i32, i32
  }
  func.func @transform_1(%arg0: i32) -> (i32, i32) {
    %c0_i32 = arith.constant 0 : i32
    %c0_i32_0 = arith.constant 0 : i32
    %c0_i32_1 = arith.constant 0 : i32
    return %c0_i32, %c0_i32_0 : i32, i32
  }
  func.func @transform_2(%arg0: i32) -> (i32, i32) {
    %c0_i32 = arith.constant 0 : i32
    %c0_i32_0 = arith.constant 0 : i32
    %c0_i32_1 = arith.constant 0 : i32
    return %c0_i32, %c0_i32_0 : i32, i32
  }
  func.func @transform_3(%arg0: i32) -> (i32, i32, i32) {
    %c0_i32 = arith.constant 0 : i32
    %c0_i32_0 = arith.constant 0 : i32
    %c0_i32_1 = arith.constant 0 : i32
    return %arg0, %c0_i32, %c0_i32_0 : i32, i32, i32
  }
  func.func @transform_4(%arg0: i32) -> (i32, i32) {
    %c0_i32 = arith.constant 0 : i32
    %c0_i32_0 = arith.constant 0 : i32
    %c0_i32_1 = arith.constant 0 : i32
    return %c0_i32, %c0_i32_0 : i32, i32
  }
}

</mosaic_0001>

<llo_original>
// kernel: gcnii_forward.3
$region0: #{gcnii_forward.3}
  #allocation0 [shape = 'u32[]', space=smem, size = 0x4, offset = 0x4, fixed_abs, tag = 'smem constant byte address 0x4 - core index']
  #allocation1 [shape = 'u32[144,128]{1,0:T(1,128)}', space=vmem, size = 0x12000, scoped, tag = 'internal scratch']
  %s0 = inlined_call_operand.vmem [shape: bf16[128,128], index: 0, kind: input, shape index: {}]
  %s1 = inlined_call_operand.vmem [shape: bf16[128,128], index: 1, kind: input, shape index: {}]
  %s2 = inlined_call_operand.vmem [shape: f32[1,128], index: 2, kind: input, shape index: {}]
  %s3 = inlined_call_operand.vmem [shape: f32[128,128], index: 3, kind: output, shape index: {0}]
  %s4 = inlined_call_operand.vmem [shape: bf16[128,128], index: 4, kind: output, shape index: {1}]
  %5 = xla_tuple %s3, %s4
  %s6 = sld [smem:[#allocation0]]
  $region53: #{gcnii_forward.3} parent=0
    _
  %s8 = ssub.s32 1, %s6
  %s9 = scalar_select 0, %s8, %s6
  loop: start=0, step=1, limit=4
  $region2: #{gcnii_forward.3} parent=0 // loop_pre_header
    _
  $region3: #{gcnii_forward.3} parent=0 // loop_header
    %s11 = sphi 0, %s15
    %p12 = scmp.ge.s32.totalorder %s11, 4
    %s21 = sphi 0, %s23
    %s24 = sphi 0, %s21
    %s25 = sphi 0, %s24
    %s41 = sphi 0, %s25
    %s45 = sphi 0, %s45
    %s47 = sphi 0, %s45
    %s48 = sphi 0, %s47
    %s62 = sphi 0, %s48
    %s66 = sphi 0, %s66
    %s68 = sphi 0, %s66
    %s69 = sphi 0, %s68
    %s83 = sphi 0, %s69
    %s89 = sphi 0, %s91
    %s92 = sphi 0, %s89
    %s93 = sphi 0, %s92
    %s109 = sphi 0, %s93
    %s115 = sphi 0, %s117
    %s118 = sphi 0, %s115
    %s119 = sphi 0, %s118
    %s135 = sphi 0, %s119
  $region4: #{gcnii_forward.3} parent=0 // loop_header_branch
    %14 = sbr.rel (%p12) target = $region8
  $region5: #{gcnii_forward.3} parent=0 // loop_body
    %s16 = ssub.s32 %s11, 1
    %s17 = ssub.s32 %s11, 2
    %s18 = sadd.s32 %s11, 1
    %s19 = ssub.s32 %s11, %s18
    %p20 = scmp.eq.s32.totalorder %s19, 0
    %s22 = sadd.s32 %s21, 1
    %s23 = scalar_select %p20, %s21, %s22
    %p26 = pneg %p20
    %p27 = scmp.eq.s32.totalorder %s11, 1
    %p28 = por %p26, %p27
    %p29 = scmp.ne.s32.totalorder %s21, %s24
    %p30 = scmp.eq.s32.totalorder %s11, 0
    %p31 = por %p29, %p30
    %p32 = scmp.ne.s32.totalorder %s21, %s24
    %p33 = scmp.eq.s32.totalorder %s16, 1
    %p34 = por %p32, %p33
    %p35 = scmp.ne.s32.totalorder %s24, %s25
    %p36 = scmp.eq.s32.totalorder %s16, 0
    %p37 = por %p35, %p36
    %p38 = scmp.ne.s32.totalorder %s24, %s25
    %p39 = scmp.eq.s32.totalorder %s17, 1
    %p40 = por %p38, %p39
    %p42 = scmp.ne.s32.totalorder %s25, %s41
    %p43 = scmp.eq.s32.totalorder %s17, 0
    %p44 = por %p42, %p43
    %s46 = sadd.s32 %s45, 1
    %p49 = scmp.eq.s32.totalorder %s11, 1
    %p50 = scmp.ne.s32.totalorder %s45, %s47
    %p51 = scmp.eq.s32.totalorder %s11, 0
    %p52 = por %p50, %p51
    %p53 = scmp.ne.s32.totalorder %s45, %s47
    %p54 = scmp.eq.s32.totalorder %s16, 1
    %p55 = por %p53, %p54
    %p56 = scmp.ne.s32.totalorder %s47, %s48
    %p57 = scmp.eq.s32.totalorder %s16, 0
    %p58 = por %p56, %p57
    %p59 = scmp.ne.s32.totalorder %s47, %s48
    %p60 = scmp.eq.s32.totalorder %s17, 1
    %p61 = por %p59, %p60
    %p63 = scmp.ne.s32.totalorder %s48, %s62
    %p64 = scmp.eq.s32.totalorder %s17, 0
    %p65 = por %p63, %p64
    %s67 = sadd.s32 %s66, 1
    %p70 = scmp.eq.s32.totalorder %s11, 1
    %p71 = scmp.ne.s32.totalorder %s66, %s68
    %p72 = scmp.eq.s32.totalorder %s11, 0
    %p73 = por %p71, %p72
    %p74 = scmp.ne.s32.totalorder %s66, %s68
    %p75 = scmp.eq.s32.totalorder %s16, 1
    %p76 = por %p74, %p75
    %p77 = scmp.ne.s32.totalorder %s68, %s69
    %p78 = scmp.eq.s32.totalorder %s16, 0
    %p79 = por %p77, %p78
    %p80 = scmp.ne.s32.totalorder %s68, %s69
    %p81 = scmp.eq.s32.totalorder %s17, 1
    %p82 = por %p80, %p81
    %p84 = scmp.ne.s32.totalorder %s69, %s83
    %p85 = scmp.eq.s32.totalorder %s17, 0
    %p86 = por %p84, %p85
    %s87 = ssub.s32 %s11, %s18
    %p88 = scmp.eq.s32.totalorder %s87, 0
    %s90 = sadd.s32 %s89, 1
    %s91 = scalar_select %p88, %s89, %s90
    %p94 = pneg %p88
    %p95 = scmp.eq.s32.totalorder %s11, 1
    %p96 = por %p94, %p95
    %p97 = scmp.ne.s32.totalorder %s89, %s92
    %p98 = scmp.eq.s32.totalorder %s11, 0
    %p99 = por %p97, %p98
    %p100 = scmp.ne.s32.totalorder %s89, %s92
    %p101 = scmp.eq.s32.totalorder %s16, 1
    %p102 = por %p100, %p101
    %p103 = scmp.ne.s32.totalorder %s92, %s93
    %p104 = scmp.eq.s32.totalorder %s16, 0
    %p105 = por %p103, %p104
    %p106 = scmp.ne.s32.totalorder %s92, %s93
    %p107 = scmp.eq.s32.totalorder %s17, 1
    %p108 = por %p106, %p107
    %p110 = scmp.ne.s32.totalorder %s93, %s109
    %p111 = scmp.eq.s32.totalorder %s17, 0
    %p112 = por %p110, %p111
    %s113 = ssub.s32 %s11, %s18
    %p114 = scmp.eq.s32.totalorder %s113, 0
    %s116 = sadd.s32 %s115, 1
    %s117 = scalar_select %p114, %s115, %s116
    %p120 = pneg %p114
    %p121 = scmp.eq.s32.totalorder %s11, 1
    %p122 = por %p120, %p121
    %p123 = scmp.ne.s32.totalorder %s115, %s118
    %p124 = scmp.eq.s32.totalorder %s11, 0
    %p125 = por %p123, %p124
    %p126 = scmp.ne.s32.totalorder %s115, %s118
    %p127 = scmp.eq.s32.totalorder %s16, 1
    %p128 = por %p126, %p127
    %p129 = scmp.ne.s32.totalorder %s118, %s119
    %p130 = scmp.eq.s32.totalorder %s16, 0
    %p131 = por %p129, %p130
    %p132 = scmp.ne.s32.totalorder %s118, %s119
    %p133 = scmp.eq.s32.totalorder %s17, 1
    %p134 = por %p132, %p133
    %p136 = scmp.ne.s32.totalorder %s119, %s135
    %p137 = scmp.eq.s32.totalorder %s17, 0
    %p138 = por %p136, %p137
    %p139 = scmp.le.s32.totalorder 1, %s11
    %p140 = scmp.lt.s32.totalorder %s11, 3
    %p141 = pnand %p139, %p140
    %p142 = pneg %p141
    // Predicated region
    $region9: #{gcnii_forward.3} parent=5 // pred_check
      _
    $region10: #{gcnii_forward.3} parent=5 // pred_check_branch
      %144 = sbr.rel (%p141) target = $region12
    $region11: #{gcnii_forward.3} parent=5 // pred_region
      %s145 = ssub.s32 %s11, 1
      // Predicated region
      $region13: #{gcnii_forward.3} parent=11 // pred_check
        %p146 = pneg %p58
      $region14: #{gcnii_forward.3} parent=11 // pred_check_branch
        %148 = sbr.rel (%p146) target = $region16
      $region15: #{gcnii_forward.3} parent=11 // pred_region
        _
      $region16: #{gcnii_forward.3} parent=11 // pred_fallthru
        _
      // Predicated region
      $region17: #{gcnii_forward.3} parent=11 // pred_check
        %p149 = pneg %p79
      $region18: #{gcnii_forward.3} parent=11 // pred_check_branch
        %151 = sbr.rel (%p149) target = $region20
      $region19: #{gcnii_forward.3} parent=11 // pred_region
        _
      $region20: #{gcnii_forward.3} parent=11 // pred_fallthru
        _
    $region12: #{gcnii_forward.3} parent=5 // pred_fallthru
      _
    %p152 = scmp.lt.s32.totalorder %s11, 2
    // Predicated region
    $region21: #{gcnii_forward.3} parent=5 // pred_check
      %p153 = pneg %p152
    $region22: #{gcnii_forward.3} parent=5 // pred_check_branch
      %155 = sbr.rel (%p153) target = $region24
    $region23: #{gcnii_forward.3} parent=5 // pred_region
      // Predicated region
      $region25: #{gcnii_forward.3} parent=23 // pred_check
        %p156 = pneg %p31
      $region26: #{gcnii_forward.3} parent=23 // pred_check_branch
        %158 = sbr.rel (%p156) target = $region28
      $region27: #{gcnii_forward.3} parent=23 // pred_region
        %s159 = smul.u32 8, %s11
        %p160 = scmp.lt.s32.totalorder %s159, 15
        %s161 = scalar_select %p160, %s159, 15
        %s162 = smul.addr %s161, 4
        %s163 = scalar_lea.vmem %s0, %s162
        %s164 = smul.u32 8, %s11
      $region28: #{gcnii_forward.3} parent=23 // pred_fallthru
        _
    $region24: #{gcnii_forward.3} parent=5 // pred_fallthru
      _
    %p165 = scmp.le.s32.totalorder 1, %s11
    %p166 = scmp.lt.s32.totalorder %s11, 3
    %p167 = pnand %p165, %p166
    %p168 = pneg %p167
    // Predicated region
    $region29: #{gcnii_forward.3} parent=5 // pred_check
      _
    $region30: #{gcnii_forward.3} parent=5 // pred_check_branch
      %170 = sbr.rel (%p167) target = $region32
    $region31: #{gcnii_forward.3} parent=5 // pred_region
      %s171 = ssub.s32 %s11, 1
      %s172 = smul.u32 8, %s16
      %p173 = scmp.lt.s32.totalorder %s172, 15
      %s174 = scalar_select %p173, %s172, 15
      %s175 = smul.addr %s174, 4
      %s176 = scalar_lea.vmem %s0, %s175
      %p177 = pneg %p37
      %p178 = pneg %p34
      %p179 = pneg %p58
      %p180 = pneg %p55
      %p181 = pneg %p79
      %p182 = pneg %p76
      %p183 = pneg %p105
      %p184 = pneg %p102
      %s185 = smul.u32 8, %s16
      %p186 = scmp.lt.s32.totalorder %s185, 15
      %s187 = scalar_select %p186, %s185, 15
      %s188 = smul.addr %s187, 8
      %s189 = scalar_lea.vmem %s3, %s188
      %p190 = pneg %p131
      %p191 = pneg %p128
      %s192 = smul.u32 8, %s16
      %p193 = scmp.lt.s32.totalorder %s192, 15
      %s194 = scalar_select %p193, %s192, 15
      %s195 = smul.addr %s194, 4
      %s196 = scalar_lea.vmem %s4, %s195
      %s197 = smul.u32 8, %s16
      %p198 = scmp.lt.s32.totalorder %s197, 15
      %s199 = scalar_select %p198, %s197, 15
      %s200 = smul.addr %s199, 4
      %s201 = scalar_lea.vmem %s0, %s200
      %s202 = smul.u32 8, %s16
      %s203 = smul.u32 8, %s16
      %p204 = scmp.lt.s32.totalorder %s203, 15
      %s205 = scalar_select %p204, %s203, 15
      %s206 = smul.addr %s205, 8
      %s207 = scalar_lea.vmem %s3, %s206
      %s208 = smul.u32 8, %s16
      %s209 = smul.u32 8, %s16
      %p210 = scmp.lt.s32.totalorder %s209, 15
      %s211 = scalar_select %p210, %s209, 15
      %s212 = smul.addr %s211, 4
      %s213 = scalar_lea.vmem %s4, %s212
      %s214 = smul.u32 8, %s16
      %v216 = vld [vmem:[%s201] sm:$0xf]
      %v217 = vld [vmem:[%s201 + $0x4] sm:$0xf]
      %v218 = vld [vmem:[%s201 + $0x8] sm:$0xf]
      %v219 = vld [vmem:[%s201 + $0xc] sm:$0xf]
      %v220 = vld [vmem:[%s201 + $0x10] sm:$0xf]
      %v221 = vld [vmem:[%s201 + $0x14] sm:$0xf]
      %v222 = vld [vmem:[%s201 + $0x18] sm:$0xf]
      %v223 = vld [vmem:[%s201 + $0x1c] sm:$0xf]
      %v224 = vld [vmem:[%s1] sm:$0xf]
      %v225 = vld [vmem:[%s1 + $0x4] sm:$0xf]
      %v226 = vld [vmem:[%s1 + $0x8] sm:$0xf]
      %v227 = vld [vmem:[%s1 + $0xc] sm:$0xf]
      %v228 = vld [vmem:[%s1 + $0x10] sm:$0xf]
      %v229 = vld [vmem:[%s1 + $0x14] sm:$0xf]
      %v230 = vld [vmem:[%s1 + $0x18] sm:$0xf]
      %v231 = vld [vmem:[%s1 + $0x1c] sm:$0xf]
      %v232 = vld [vmem:[%s1 + $0x20] sm:$0xf]
      %v233 = vld [vmem:[%s1 + $0x24] sm:$0xf]
      %v234 = vld [vmem:[%s1 + $0x28] sm:$0xf]
      %v235 = vld [vmem:[%s1 + $0x2c] sm:$0xf]
      %v236 = vld [vmem:[%s1 + $0x30] sm:$0xf]
      %v237 = vld [vmem:[%s1 + $0x34] sm:$0xf]
      %v238 = vld [vmem:[%s1 + $0x38] sm:$0xf]
      %v239 = vld [vmem:[%s1 + $0x3c] sm:$0xf]
      %v240 = vld [vmem:[%s2] sm:$0x1]
      %v242 = vlaneseq
      %v243 = vshrl.u32 %v242, 7
      %v244 = vsub.s32 0, %v243
      %v245 = vrot.slane %v240, %v244
      %v255 = vunpack.c.l.b16 %v216
      %v256 = vunpack.c.l.b16 %v217
      %v257 = vunpack.c.l.b16 %v218
      %v258 = vunpack.c.l.b16 %v219
      %v259 = vunpack.c.l.b16 %v220
      %v260 = vunpack.c.l.b16 %v221
      %v261 = vunpack.c.l.b16 %v222
      %v262 = vunpack.c.l.b16 %v223
      %v263 = vpack.c.b16 %v256, %v255
      %v264 = vpack.c.b16 %v258, %v257
      %v265 = vpack.c.b16 %v260, %v259
      %v266 = vpack.c.b16 %v262, %v261
      %v287 = vunpack.c.l.b16 %v224
      %v288 = vunpack.c.l.b16 %v225
      %v289 = vunpack.c.l.b16 %v226
      %v290 = vunpack.c.l.b16 %v227
      %v291 = vunpack.c.l.b16 %v228
      %v292 = vunpack.c.l.b16 %v229
      %v293 = vunpack.c.l.b16 %v230
      %v294 = vunpack.c.l.b16 %v231
      %v295 = vunpack.c.l.b16 %v232
      %v296 = vunpack.c.l.b16 %v233
      %v297 = vunpack.c.l.b16 %v234
      %v298 = vunpack.c.l.b16 %v235
      %v299 = vunpack.c.l.b16 %v236
      %v300 = vunpack.c.l.b16 %v237
      %v301 = vunpack.c.l.b16 %v238
      %v302 = vunpack.c.l.b16 %v239
      %v303 = vpack.c.b16 %v288, %v287
      %v304 = vpack.c.b16 %v290, %v289
      %v305 = vpack.c.b16 %v292, %v291
      %v306 = vpack.c.b16 %v294, %v293
      %v307 = vpack.c.b16 %v296, %v295
      %v308 = vpack.c.b16 %v298, %v297
      %v309 = vpack.c.b16 %v300, %v299
      %v310 = vpack.c.b16 %v302, %v301
      %319 = vmatprep.subr.bf16.mxu0 0
      %320 = vmatpush1.bf16.msra.mxu0 %v303
      %321 = vmatprep.subr.bf16.mxu0 0
      %322 = vmatpush1.bf16.msra.mxu0 %v304
      %323 = vmatprep.subr.bf16.mxu0 0
      %324 = vmatpush1.bf16.msra.mxu0 %v305
      %325 = vmatprep.subr.bf16.mxu0 0
      %326 = vmatpush1.bf16.msra.mxu0 %v306
      %327 = vmatprep.subr.bf16.mxu0 0
      %328 = vmatpush1.bf16.msra.mxu0 %v307
      %329 = vmatprep.subr.bf16.mxu0 0
      %330 = vmatpush1.bf16.msra.mxu0 %v308
      %331 = vmatprep.subr.bf16.mxu0 0
      %332 = vmatpush1.bf16.msra.mxu0 %v309
      %333 = vmatprep.subr.bf16.mxu0 0
      %334 = vmatpush1.bf16.msra.mxu0 %v310
      %335 = vmatprep.subr.bf16.mxu0 0
      %336 = vmatpush1.bf16.msra.mxu0 0
      %337 = vmatprep.subr.bf16.mxu0 0
      %338 = vmatpush1.bf16.msra.mxu0 0
      %339 = vmatprep.subr.bf16.mxu0 0
      %340 = vmatpush1.bf16.msra.mxu0 0
      %341 = vmatprep.subr.bf16.mxu0 0
      %342 = vmatpush1.bf16.msra.mxu0 0
      %343 = vmatprep.subr.bf16.mxu0 0
      %344 = vmatpush1.bf16.msra.mxu0 0
      %345 = vmatprep.subr.bf16.mxu0 0
      %346 = vmatpush1.bf16.msra.mxu0 0
      %347 = vmatprep.subr.bf16.mxu0 0
      %348 = vmatpush1.bf16.msra.mxu0 0
      %349 = vmatprep.subr.bf16.mxu0 0
      %350 = vmatpush1.bf16.msra.mxu0 0
      %351 = vmatprep.mubr.bf16.mxu0 0
      %352 = vmatmul.mubr.bf16.gmra.mrb[0].mxu0 %v263
      %v353 = vpop.f32.mrb[0].mxu0
      %v354 = vadd.f32 %v245, %v353
      %v355 = vpop.f32.mrb[0].mxu0
      %v356 = vpop.f32.mrb[0].mxu0
      %v357 = vadd.f32 %v245, %v356
      %v358 = vpop.f32.mrb[0].mxu0
      %359 = vmatprep.mubr.bf16.mxu0 0
      %360 = vmatmul.mubr.bf16.gmra.mrb[0].mxu0 %v264
      %v361 = vpop.f32.mrb[0].mxu0
      %v362 = vadd.f32 %v245, %v361
      %v363 = vpop.f32.mrb[0].mxu0
      %v364 = vpop.f32.mrb[0].mxu0
      %v365 = vadd.f32 %v245, %v364
      %v366 = vpop.f32.mrb[0].mxu0
      %367 = vmatprep.mubr.bf16.mxu0 0
      %368 = vmatmul.mubr.bf16.gmra.mrb[0].mxu0 %v265
      %v369 = vpop.f32.mrb[0].mxu0
      %v370 = vadd.f32 %v245, %v369
      %v371 = vpop.f32.mrb[0].mxu0
      %v372 = vpop.f32.mrb[0].mxu0
      %v373 = vadd.f32 %v245, %v372
      %v374 = vpop.f32.mrb[0].mxu0
      %375 = vmatprep.mubr.bf16.mxu0 0
      %376 = vmatmul.mubr.bf16.gmra.mrb[0].mxu0 %v266
      %v377 = vpop.f32.mrb[0].mxu0
      %v378 = vadd.f32 %v245, %v377
      %v379 = vpop.f32.mrb[0].mxu0
      %v380 = vpop.f32.mrb[0].mxu0
      %v381 = vadd.f32 %v245, %v380
      %v382 = vpop.f32.mrb[0].mxu0
      %383 = vdwg.mxu0
      %v384 = vmax.f32 %v354, 0.0
      %v385 = vmax.f32 %v357, 0.0
      %v386 = vmax.f32 %v362, 0.0
      %v387 = vmax.f32 %v365, 0.0
      %v388 = vmax.f32 %v370, 0.0
      %v389 = vmax.f32 %v373, 0.0
      %v390 = vmax.f32 %v378, 0.0
      %v391 = vmax.f32 %v381, 0.0
      %392 = vst [vmem:[%s207] sm:$0xff] %v384
      %393 = vst [vmem:[%s207 + $0x8] sm:$0xff] %v385
      %394 = vst [vmem:[%s207 + $0x10] sm:$0xff] %v386
      %395 = vst [vmem:[%s207 + $0x18] sm:$0xff] %v387
      %396 = vst [vmem:[%s207 + $0x20] sm:$0xff] %v388
      %397 = vst [vmem:[%s207 + $0x28] sm:$0xff] %v389
      %398 = vst [vmem:[%s207 + $0x30] sm:$0xff] %v390
      %399 = vst [vmem:[%s207 + $0x38] sm:$0xff] %v391
      %v400 = vpack.c.bf16 %v385, %v384
      %v401 = vpack.c.bf16 %v387, %v386
      %v402 = vpack.c.bf16 %v389, %v388
      %v403 = vpack.c.bf16 %v391, %v390
      %v408 = vunpack.c.l.b16 %v400
      %v409 = vunpack.c.h.b16 %v400
      %v410 = vunpack.c.l.b16 %v401
      %v411 = vunpack.c.h.b16 %v401
      %v412 = vunpack.c.l.b16 %v402
      %v413 = vunpack.c.h.b16 %v402
      %v414 = vunpack.c.l.b16 %v403
      %v415 = vunpack.c.h.b16 %v403
      %v416 = vpack.c.b16 %v408, %v408
      %v417 = vpack.c.b16 %v409, %v409
      %v418 = vpack.c.b16 %v410, %v410
      %v419 = vpack.c.b16 %v411, %v411
      %v420 = vpack.c.b16 %v412, %v412
      %v421 = vpack.c.b16 %v413, %v413
      %v422 = vpack.c.b16 %v414, %v414
      %v423 = vpack.c.b16 %v415, %v415
      %432 = vst [vmem:[%s213] sm:$0xf] %v416
      %433 = vst [vmem:[%s213 + $0x4] sm:$0xf] %v417
      %434 = vst [vmem:[%s213 + $0x8] sm:$0xf] %v418
      %435 = vst [vmem:[%s213 + $0xc] sm:$0xf] %v419
      %436 = vst [vmem:[%s213 + $0x10] sm:$0xf] %v420
      %437 = vst [vmem:[%s213 + $0x14] sm:$0xf] %v421
      %438 = vst [vmem:[%s213 + $0x18] sm:$0xf] %v422
      %439 = vst [vmem:[%s213 + $0x1c] sm:$0xf] %v423
      %s440 = smul.u32 8, %s16
      %p441 = scmp.lt.s32.totalorder %s440, 15
      %s442 = scalar_select %p441, %s440, 15
      %s443 = smul.addr %s442, 8
      %s444 = scalar_lea.vmem %s3, %s443
      %s445 = smul.u32 8, %s16
      %p446 = scmp.lt.s32.totalorder %s445, 15
      %s447 = scalar_select %p446, %s445, 15
      %s448 = smul.addr %s447, 4
      %s449 = scalar_lea.vmem %s4, %s448
      // Predicated region
      $region33: #{gcnii_forward.3} parent=31 // pred_check
        %p450 = pneg %p102
      $region34: #{gcnii_forward.3} parent=31 // pred_check_branch
        %452 = sbr.rel (%p450) target = $region36
      $region35: #{gcnii_forward.3} parent=31 // pred_region
        %s453 = smul.u32 8, %s16
      $region36: #{gcnii_forward.3} parent=31 // pred_fallthru
        _
      // Predicated region
      $region37: #{gcnii_forward.3} parent=31 // pred_check
        %p454 = pneg %p128
      $region38: #{gcnii_forward.3} parent=31 // pred_check_branch
        %456 = sbr.rel (%p454) target = $region40
      $region39: #{gcnii_forward.3} parent=31 // pred_region
        %s457 = smul.u32 8, %s16
      $region40: #{gcnii_forward.3} parent=31 // pred_fallthru
        _
    $region32: #{gcnii_forward.3} parent=5 // pred_fallthru
      _
    %p458 = scmp.le.s32.totalorder 2, %s11
    // Predicated region
    $region41: #{gcnii_forward.3} parent=5 // pred_check
      %p459 = pneg %p458
    $region42: #{gcnii_forward.3} parent=5 // pred_check_branch
      %461 = sbr.rel (%p459) target = $region44
    $region43: #{gcnii_forward.3} parent=5 // pred_region
      %s462 = ssub.s32 %s11, 2
      // Predicated region
      $region45: #{gcnii_forward.3} parent=43 // pred_check
        %p463 = pneg %p108
      $region46: #{gcnii_forward.3} parent=43 // pred_check_branch
        %465 = sbr.rel (%p463) target = $region48
      $region47: #{gcnii_forward.3} parent=43 // pred_region
        %s466 = smul.u32 8, %s17
        %p467 = scmp.lt.s32.totalorder %s466, 15
        %s468 = scalar_select %p467, %s466, 15
        %s469 = smul.addr %s468, 8
        %s470 = scalar_lea.vmem %s3, %s469
      $region48: #{gcnii_forward.3} parent=43 // pred_fallthru
        _
      // Predicated region
      $region49: #{gcnii_forward.3} parent=43 // pred_check
        %p471 = pneg %p134
      $region50: #{gcnii_forward.3} parent=43 // pred_check_branch
        %473 = sbr.rel (%p471) target = $region52
      $region51: #{gcnii_forward.3} parent=43 // pred_region
        %s474 = smul.u32 8, %s17
        %p475 = scmp.lt.s32.totalorder %s474, 15
        %s476 = scalar_select %p475, %s474, 15
        %s477 = smul.addr %s476, 4
        %s478 = scalar_lea.vmem %s4, %s477
      $region52: #{gcnii_forward.3} parent=43 // pred_fallthru
        _
    $region44: #{gcnii_forward.3} parent=5 // pred_fallthru
      _
  $region6: #{gcnii_forward.3} parent=0 // loop_footer
    %s15 = sadd.s32 1, %s11
  $region7: #{gcnii_forward.3} parent=0 // loop_footer_branch
    %10 = sbr.rel target = $region3
  $region8: #{gcnii_forward.3} parent=0 // loop_exit
    _

// kernel: gcnii_forward.5
$region0: #{gcnii_forward.5}
  #allocation0 [shape = 'u32[]', space=smem, size = 0x4, offset = 0x4, fixed_abs, tag = 'smem constant byte address 0x4 - core index']
  #allocation1 [shape = 'u32[144,128]{1,0:T(1,128)}', space=vmem, size = 0x12000, scoped, tag = 'internal scratch']
  %s0 = inlined_call_operand.vmem [shape: bf16[128,128], index: 0, kind: input, shape index: {}]
  %s1 = inlined_call_operand.vmem [shape: f32[128,128], index: 1, kind: input, shape index: {}]
  %s2 = inlined_call_operand.vmem [shape: f32[1,128], index: 2, kind: input, shape index: {}]
  %s3 = inlined_call_operand.vmem [shape: f32[128,128], index: 3, kind: output, shape index: {}]
  %s4 = sld [smem:[#allocation0]]
  $region45: #{gcnii_forward.5} parent=0
    _
  %s6 = ssub.s32 1, %s4
  %s7 = scalar_select 0, %s6, %s4
  loop: start=0, step=1, limit=4
  $region2: #{gcnii_forward.5} parent=0 // loop_pre_header
    _
  $region3: #{gcnii_forward.5} parent=0 // loop_header
    %s9 = sphi 0, %s13
    %p10 = scmp.ge.s32.totalorder %s9, 4
    %s19 = sphi 0, %s21
    %s22 = sphi 0, %s19
    %s23 = sphi 0, %s22
    %s39 = sphi 0, %s23
    %s43 = sphi 0, %s43
    %s45 = sphi 0, %s43
    %s46 = sphi 0, %s45
    %s60 = sphi 0, %s46
    %s64 = sphi 0, %s64
    %s66 = sphi 0, %s64
    %s67 = sphi 0, %s66
    %s81 = sphi 0, %s67
    %s87 = sphi 0, %s89
    %s90 = sphi 0, %s87
    %s91 = sphi 0, %s90
    %s107 = sphi 0, %s91
  $region4: #{gcnii_forward.5} parent=0 // loop_header_branch
    %12 = sbr.rel (%p10) target = $region8
  $region5: #{gcnii_forward.5} parent=0 // loop_body
    %s14 = ssub.s32 %s9, 1
    %s15 = ssub.s32 %s9, 2
    %s16 = sadd.s32 %s9, 1
    %s17 = ssub.s32 %s9, %s16
    %p18 = scmp.eq.s32.totalorder %s17, 0
    %s20 = sadd.s32 %s19, 1
    %s21 = scalar_select %p18, %s19, %s20
    %p24 = pneg %p18
    %p25 = scmp.eq.s32.totalorder %s9, 1
    %p26 = por %p24, %p25
    %p27 = scmp.ne.s32.totalorder %s19, %s22
    %p28 = scmp.eq.s32.totalorder %s9, 0
    %p29 = por %p27, %p28
    %p30 = scmp.ne.s32.totalorder %s19, %s22
    %p31 = scmp.eq.s32.totalorder %s14, 1
    %p32 = por %p30, %p31
    %p33 = scmp.ne.s32.totalorder %s22, %s23
    %p34 = scmp.eq.s32.totalorder %s14, 0
    %p35 = por %p33, %p34
    %p36 = scmp.ne.s32.totalorder %s22, %s23
    %p37 = scmp.eq.s32.totalorder %s15, 1
    %p38 = por %p36, %p37
    %p40 = scmp.ne.s32.totalorder %s23, %s39
    %p41 = scmp.eq.s32.totalorder %s15, 0
    %p42 = por %p40, %p41
    %s44 = sadd.s32 %s43, 1
    %p47 = scmp.eq.s32.totalorder %s9, 1
    %p48 = scmp.ne.s32.totalorder %s43, %s45
    %p49 = scmp.eq.s32.totalorder %s9, 0
    %p50 = por %p48, %p49
    %p51 = scmp.ne.s32.totalorder %s43, %s45
    %p52 = scmp.eq.s32.totalorder %s14, 1
    %p53 = por %p51, %p52
    %p54 = scmp.ne.s32.totalorder %s45, %s46
    %p55 = scmp.eq.s32.totalorder %s14, 0
    %p56 = por %p54, %p55
    %p57 = scmp.ne.s32.totalorder %s45, %s46
    %p58 = scmp.eq.s32.totalorder %s15, 1
    %p59 = por %p57, %p58
    %p61 = scmp.ne.s32.totalorder %s46, %s60
    %p62 = scmp.eq.s32.totalorder %s15, 0
    %p63 = por %p61, %p62
    %s65 = sadd.s32 %s64, 1
    %p68 = scmp.eq.s32.totalorder %s9, 1
    %p69 = scmp.ne.s32.totalorder %s64, %s66
    %p70 = scmp.eq.s32.totalorder %s9, 0
    %p71 = por %p69, %p70
    %p72 = scmp.ne.s32.totalorder %s64, %s66
    %p73 = scmp.eq.s32.totalorder %s14, 1
    %p74 = por %p72, %p73
    %p75 = scmp.ne.s32.totalorder %s66, %s67
    %p76 = scmp.eq.s32.totalorder %s14, 0
    %p77 = por %p75, %p76
    %p78 = scmp.ne.s32.totalorder %s66, %s67
    %p79 = scmp.eq.s32.totalorder %s15, 1
    %p80 = por %p78, %p79
    %p82 = scmp.ne.s32.totalorder %s67, %s81
    %p83 = scmp.eq.s32.totalorder %s15, 0
    %p84 = por %p82, %p83
    %s85 = ssub.s32 %s9, %s16
    %p86 = scmp.eq.s32.totalorder %s85, 0
    %s88 = sadd.s32 %s87, 1
    %s89 = scalar_select %p86, %s87, %s88
    %p92 = pneg %p86
    %p93 = scmp.eq.s32.totalorder %s9, 1
    %p94 = por %p92, %p93
    %p95 = scmp.ne.s32.totalorder %s87, %s90
    %p96 = scmp.eq.s32.totalorder %s9, 0
    %p97 = por %p95, %p96
    %p98 = scmp.ne.s32.totalorder %s87, %s90
    %p99 = scmp.eq.s32.totalorder %s14, 1
    %p100 = por %p98, %p99
    %p101 = scmp.ne.s32.totalorder %s90, %s91
    %p102 = scmp.eq.s32.totalorder %s14, 0
    %p103 = por %p101, %p102
    %p104 = scmp.ne.s32.totalorder %s90, %s91
    %p105 = scmp.eq.s32.totalorder %s15, 1
    %p106 = por %p104, %p105
    %p108 = scmp.ne.s32.totalorder %s91, %s107
    %p109 = scmp.eq.s32.totalorder %s15, 0
    %p110 = por %p108, %p109
    %p111 = scmp.le.s32.totalorder 1, %s9
    %p112 = scmp.lt.s32.totalorder %s9, 3
    %p113 = pnand %p111, %p112
    %p114 = pneg %p113
    // Predicated region
    $region9: #{gcnii_forward.5} parent=5 // pred_check
      _
    $region10: #{gcnii_forward.5} parent=5 // pred_check_branch
      %116 = sbr.rel (%p113) target = $region12
    $region11: #{gcnii_forward.5} parent=5 // pred_region
      %s117 = ssub.s32 %s9, 1
      // Predicated region
      $region13: #{gcnii_forward.5} parent=11 // pred_check
        %p118 = pneg %p56
      $region14: #{gcnii_forward.5} parent=11 // pred_check_branch
        %120 = sbr.rel (%p118) target = $region16
      $region15: #{gcnii_forward.5} parent=11 // pred_region
        _
      $region16: #{gcnii_forward.5} parent=11 // pred_fallthru
        _
      // Predicated region
      $region17: #{gcnii_forward.5} parent=11 // pred_check
        %p121 = pneg %p77
      $region18: #{gcnii_forward.5} parent=11 // pred_check_branch
        %123 = sbr.rel (%p121) target = $region20
      $region19: #{gcnii_forward.5} parent=11 // pred_region
        _
      $region20: #{gcnii_forward.5} parent=11 // pred_fallthru
        _
    $region12: #{gcnii_forward.5} parent=5 // pred_fallthru
      _
    %p124 = scmp.lt.s32.totalorder %s9, 2
    // Predicated region
    $region21: #{gcnii_forward.5} parent=5 // pred_check
      %p125 = pneg %p124
    $region22: #{gcnii_forward.5} parent=5 // pred_check_branch
      %127 = sbr.rel (%p125) target = $region24
    $region23: #{gcnii_forward.5} parent=5 // pred_region
      // Predicated region
      $region25: #{gcnii_forward.5} parent=23 // pred_check
        %p128 = pneg %p29
      $region26: #{gcnii_forward.5} parent=23 // pred_check_branch
        %130 = sbr.rel (%p128) target = $region28
      $region27: #{gcnii_forward.5} parent=23 // pred_region
        %s131 = smul.u32 8, %s9
        %p132 = scmp.lt.s32.totalorder %s131, 15
        %s133 = scalar_select %p132, %s131, 15
        %s134 = smul.addr %s133, 4
        %s135 = scalar_lea.vmem %s0, %s134
        %s136 = smul.u32 8, %s9
      $region28: #{gcnii_forward.5} parent=23 // pred_fallthru
        _
    $region24: #{gcnii_forward.5} parent=5 // pred_fallthru
      _
    %p137 = scmp.le.s32.totalorder 1, %s9
    %p138 = scmp.lt.s32.totalorder %s9, 3
    %p139 = pnand %p137, %p138
    %p140 = pneg %p139
    // Predicated region
    $region29: #{gcnii_forward.5} parent=5 // pred_check
      _
    $region30: #{gcnii_forward.5} parent=5 // pred_check_branch
      %142 = sbr.rel (%p139) target = $region32
    $region31: #{gcnii_forward.5} parent=5 // pred_region
      %s143 = ssub.s32 %s9, 1
      %s144 = smul.u32 8, %s14
      %p145 = scmp.lt.s32.totalorder %s144, 15
      %s146 = scalar_select %p145, %s144, 15
      %s147 = smul.addr %s146, 4
      %s148 = scalar_lea.vmem %s0, %s147
      %p149 = pneg %p35
      %p150 = pneg %p32
      %p151 = pneg %p56
      %p152 = pneg %p53
      %p153 = pneg %p77
      %p154 = pneg %p74
      %p155 = pneg %p103
      %p156 = pneg %p100
      %s157 = smul.u32 8, %s14
      %p158 = scmp.lt.s32.totalorder %s157, 15
      %s159 = scalar_select %p158, %s157, 15
      %s160 = smul.addr %s159, 8
      %s161 = scalar_lea.vmem %s3, %s160
      %s162 = smul.u32 8, %s14
      %p163 = scmp.lt.s32.totalorder %s162, 15
      %s164 = scalar_select %p163, %s162, 15
      %s165 = smul.addr %s164, 4
      %s166 = scalar_lea.vmem %s0, %s165
      %s167 = smul.u32 8, %s14
      %s168 = smul.u32 8, %s14
      %p169 = scmp.lt.s32.totalorder %s168, 15
      %s170 = scalar_select %p169, %s168, 15
      %s171 = smul.addr %s170, 8
      %s172 = scalar_lea.vmem %s3, %s171
      %s173 = smul.u32 8, %s14
      %v174 = vld [vmem:[%s166] sm:$0xf]
      %v175 = vld [vmem:[%s166 + $0x4] sm:$0xf]
      %v176 = vld [vmem:[%s166 + $0x8] sm:$0xf]
      %v177 = vld [vmem:[%s166 + $0xc] sm:$0xf]
      %v178 = vld [vmem:[%s166 + $0x10] sm:$0xf]
      %v179 = vld [vmem:[%s166 + $0x14] sm:$0xf]
      %v180 = vld [vmem:[%s166 + $0x18] sm:$0xf]
      %v181 = vld [vmem:[%s166 + $0x1c] sm:$0xf]
      %v182 = vunpack.c.l.bf16 %v174
      %v183 = vunpack.c.l.bf16 %v175
      %v184 = vunpack.c.l.bf16 %v176
      %v185 = vunpack.c.l.bf16 %v177
      %v186 = vunpack.c.l.bf16 %v178
      %v187 = vunpack.c.l.bf16 %v179
      %v188 = vunpack.c.l.bf16 %v180
      %v189 = vunpack.c.l.bf16 %v181
      %v190 = vld [vmem:[%s1] sm:$0xff]
      %v191 = vld [vmem:[%s1 + $0x8] sm:$0xff]
      %v192 = vld [vmem:[%s1 + $0x10] sm:$0xff]
      %v193 = vld [vmem:[%s1 + $0x18] sm:$0xff]
      %v194 = vld [vmem:[%s1 + $0x20] sm:$0xff]
      %v195 = vld [vmem:[%s1 + $0x28] sm:$0xff]
      %v196 = vld [vmem:[%s1 + $0x30] sm:$0xff]
      %v197 = vld [vmem:[%s1 + $0x38] sm:$0xff]
      %v198 = vld [vmem:[%s1 + $0x40] sm:$0xff]
      %v199 = vld [vmem:[%s1 + $0x48] sm:$0xff]
      %v200 = vld [vmem:[%s1 + $0x50] sm:$0xff]
      %v201 = vld [vmem:[%s1 + $0x58] sm:$0xff]
      %v202 = vld [vmem:[%s1 + $0x60] sm:$0xff]
      %v203 = vld [vmem:[%s1 + $0x68] sm:$0xff]
      %v204 = vld [vmem:[%s1 + $0x70] sm:$0xff]
      %v205 = vld [vmem:[%s1 + $0x78] sm:$0xff]
      %v206 = vld [vmem:[%s2] sm:$0x1]
      %v208 = vlaneseq
      %v209 = vshrl.u32 %v208, 7
      %v210 = vsub.s32 0, %v209
      %v211 = vrot.slane %v206, %v210
      %213 = vmatprep.subr.mxu0 0.0
      %214 = vmatpush1.msra.mxu0 %v190
      %215 = vmatprep.subr.mxu0 0.0
      %216 = vmatpush1.msra.mxu0 %v191
      %217 = vmatprep.subr.mxu0 0.0
      %218 = vmatpush1.msra.mxu0 %v192
      %219 = vmatprep.subr.mxu0 0.0
      %220 = vmatpush1.msra.mxu0 %v193
      %221 = vmatprep.subr.mxu0 0.0
      %222 = vmatpush1.msra.mxu0 %v194
      %223 = vmatprep.subr.mxu0 0.0
      %224 = vmatpush1.msra.mxu0 %v195
      %225 = vmatprep.subr.mxu0 0.0
      %226 = vmatpush1.msra.mxu0 %v196
      %227 = vmatprep.subr.mxu0 0.0
      %228 = vmatpush1.msra.mxu0 %v197
      %229 = vmatprep.subr.mxu0 0.0
      %230 = vmatpush1.msra.mxu0 %v198
      %231 = vmatprep.subr.mxu0 0.0
      %232 = vmatpush1.msra.mxu0 %v199
      %233 = vmatprep.subr.mxu0 0.0
      %234 = vmatpush1.msra.mxu0 %v200
      %235 = vmatprep.subr.mxu0 0.0
      %236 = vmatpush1.msra.mxu0 %v201
      %237 = vmatprep.subr.mxu0 0.0
      %238 = vmatpush1.msra.mxu0 %v202
      %239 = vmatprep.subr.mxu0 0.0
      %240 = vmatpush1.msra.mxu0 %v203
      %241 = vmatprep.subr.mxu0 0.0
      %242 = vmatpush1.msra.mxu0 %v204
      %243 = vmatprep.subr.mxu0 0.0
      %244 = vmatpush1.msra.mxu0 %v205
      %245 = vmatprep.subr.mxu0 0.0
      %246 = vmatpush1.msra.mxu0 0.0
      %247 = vmatprep.subr.mxu0 0.0
      %248 = vmatpush1.msra.mxu0 0.0
      %249 = vmatprep.subr.mxu0 0.0
      %250 = vmatpush1.msra.mxu0 0.0
      %251 = vmatprep.subr.mxu0 0.0
      %252 = vmatpush1.msra.mxu0 0.0
      %253 = vmatprep.subr.mxu0 0.0
      %254 = vmatpush1.msra.mxu0 0.0
      %255 = vmatprep.subr.mxu0 0.0
      %256 = vmatpush1.msra.mxu0 0.0
      %257 = vmatprep.subr.mxu0 0.0
      %258 = vmatpush1.msra.mxu0 0.0
      %259 = vmatprep.subr.mxu0 0.0
      %260 = vmatpush1.msra.mxu0 0.0
      %261 = vmatprep.subr.mxu0 0.0
      %262 = vmatpush1.msra.mxu0 0.0
      %263 = vmatprep.subr.mxu0 0.0
      %264 = vmatpush1.msra.mxu0 0.0
      %265 = vmatprep.subr.mxu0 0.0
      %266 = vmatpush1.msra.mxu0 0.0
      %267 = vmatprep.subr.mxu0 0.0
      %268 = vmatpush1.msra.mxu0 0.0
      %269 = vmatprep.subr.mxu0 0.0
      %270 = vmatpush1.msra.mxu0 0.0
      %271 = vmatprep.subr.mxu0 0.0
      %272 = vmatpush1.msra.mxu0 0.0
      %273 = vmatprep.subr.mxu0 0.0
      %274 = vmatpush1.msra.mxu0 0.0
      %275 = vmatprep.subr.mxu0 0.0
      %276 = vmatpush1.msra.mxu0 0.0
      %277 = vmatprep.mubr.f32.mxu0 0.0
      %278 = vmatmul.mubr.f32.gmra.mrb[0].mxu0 %v182
      %v279 = vpop.f32.mrb[0].mxu0
      %v280 = vadd.f32 %v211, %v279
      %v281 = vpop.f32.mrb[0].mxu0
      %282 = vmatprep.mubr.f32.mxu0 0.0
      %283 = vmatmul.mubr.f32.gmra.mrb[0].mxu0 %v183
      %v284 = vpop.f32.mrb[0].mxu0
      %v285 = vadd.f32 %v211, %v284
      %v286 = vpop.f32.mrb[0].mxu0
      %287 = vmatprep.mubr.f32.mxu0 0.0
      %288 = vmatmul.mubr.f32.gmra.mrb[0].mxu0 %v184
      %v289 = vpop.f32.mrb[0].mxu0
      %v290 = vadd.f32 %v211, %v289
      %v291 = vpop.f32.mrb[0].mxu0
      %292 = vmatprep.mubr.f32.mxu0 0.0
      %293 = vmatmul.mubr.f32.gmra.mrb[0].mxu0 %v185
      %v294 = vpop.f32.mrb[0].mxu0
      %v295 = vadd.f32 %v211, %v294
      %v296 = vpop.f32.mrb[0].mxu0
      %297 = vmatprep.mubr.f32.mxu0 0.0
      %298 = vmatmul.mubr.f32.gmra.mrb[0].mxu0 %v186
      %v299 = vpop.f32.mrb[0].mxu0
      %v300 = vadd.f32 %v211, %v299
      %v301 = vpop.f32.mrb[0].mxu0
      %302 = vmatprep.mubr.f32.mxu0 0.0
      %303 = vmatmul.mubr.f32.gmra.mrb[0].mxu0 %v187
      %v304 = vpop.f32.mrb[0].mxu0
      %v305 = vadd.f32 %v211, %v304
      %v306 = vpop.f32.mrb[0].mxu0
      %307 = vmatprep.mubr.f32.mxu0 0.0
      %308 = vmatmul.mubr.f32.gmra.mrb[0].mxu0 %v188
      %v309 = vpop.f32.mrb[0].mxu0
      %v310 = vadd.f32 %v211, %v309
      %v311 = vpop.f32.mrb[0].mxu0
      %312 = vmatprep.mubr.f32.mxu0 0.0
      %313 = vmatmul.mubr.f32.gmra.mrb[0].mxu0 %v189
      %v314 = vpop.f32.mrb[0].mxu0
      %v315 = vadd.f32 %v211, %v314
      %v316 = vpop.f32.mrb[0].mxu0
      %317 = vdwg.mxu0
      %v318 = vlaneseq
      %v319 = vand.u32 %v318, 127
      %vm320 = vcmp.lt.s32.totalorder %v319, 4
      %v321 = vsel %vm320, %v280, -1e+30
      %v322 = vsel %vm320, %v285, -1e+30
      %v323 = vsel %vm320, %v290, -1e+30
      %v324 = vsel %vm320, %v295, -1e+30
      %v325 = vsel %vm320, %v300, -1e+30
      %v326 = vsel %vm320, %v305, -1e+30
      %v327 = vsel %vm320, %v310, -1e+30
      %v328 = vsel %vm320, %v315, -1e+30
      %329 = vmax.xlane.f32.xlu0 %v321
      %v330 = vpop.xlane.xlu0 %329
      %331 = vmax.xlane.f32.xlu0 %v322
      %v332 = vpop.xlane.xlu0 %331
      %333 = vmax.xlane.f32.xlu0 %v323
      %v334 = vpop.xlane.xlu0 %333
      %335 = vmax.xlane.f32.xlu0 %v324
      %v336 = vpop.xlane.xlu0 %335
      %337 = vmax.xlane.f32.xlu0 %v325
      %v338 = vpop.xlane.xlu0 %337
      %339 = vmax.xlane.f32.xlu0 %v326
      %v340 = vpop.xlane.xlu0 %339
      %341 = vmax.xlane.f32.xlu0 %v327
      %v342 = vpop.xlane.xlu0 %341
      %343 = vmax.xlane.f32.xlu0 %v328
      %v344 = vpop.xlane.xlu0 %343
      %v345 = vsub.f32 %v321, %v330
      %v346 = vsub.f32 %v322, %v332
      %v347 = vsub.f32 %v323, %v334
      %v348 = vsub.f32 %v324, %v336
      %v349 = vsub.f32 %v325, %v338
      %v350 = vsub.f32 %v326, %v340
      %v351 = vsub.f32 %v327, %v342
      %v352 = vsub.f32 %v328, %v344
      %v353 = vmul.f32 %v345, 1.442695
      %v354 = vpow.pop %v353
      %v355 = vmul.f32 %v346, 1.442695
      %v356 = vpow.pop %v355
      %v357 = vmul.f32 %v347, 1.442695
      %v358 = vpow.pop %v357
      %v359 = vmul.f32 %v348, 1.442695
      %v360 = vpow.pop %v359
      %v361 = vmul.f32 %v349, 1.442695
      %v362 = vpow.pop %v361
      %v363 = vmul.f32 %v350, 1.442695
      %v364 = vpow.pop %v363
      %v365 = vmul.f32 %v351, 1.442695
      %v366 = vpow.pop %v365
      %v367 = vmul.f32 %v352, 1.442695
      %v368 = vpow.pop %v367
      %369 = vadd.xlane.f32.xlu0 %v354
      %v370 = vpop.xlane.xlu0 %369
      %371 = vadd.xlane.f32.xlu0 %v356
      %v372 = vpop.xlane.xlu0 %371
      %373 = vadd.xlane.f32.xlu0 %v358
      %v374 = vpop.xlane.xlu0 %373
      %375 = vadd.xlane.f32.xlu0 %v360
      %v376 = vpop.xlane.xlu0 %375
      %377 = vadd.xlane.f32.xlu0 %v362
      %v378 = vpop.xlane.xlu0 %377
      %379 = vadd.xlane.f32.xlu0 %v364
      %v380 = vpop.xlane.xlu0 %379
      %381 = vadd.xlane.f32.xlu0 %v366
      %v382 = vpop.xlane.xlu0 %381
      %383 = vadd.xlane.f32.xlu0 %v368
      %v384 = vpop.xlane.xlu0 %383
      %v385 = vlog2.pop %v370
      %v386 = vmul.f32 %v385, 0.6931472
      %v387 = vlog2.pop %v372
      %v388 = vmul.f32 %v387, 0.6931472
      %v389 = vlog2.pop %v374
      %v390 = vmul.f32 %v389, 0.6931472
      %v391 = vlog2.pop %v376
      %v392 = vmul.f32 %v391, 0.6931472
      %v393 = vlog2.pop %v378
      %v394 = vmul.f32 %v393, 0.6931472
      %v395 = vlog2.pop %v380
      %v396 = vmul.f32 %v395, 0.6931472
      %v397 = vlog2.pop %v382
      %v398 = vmul.f32 %v397, 0.6931472
      %v399 = vlog2.pop %v384
      %v400 = vmul.f32 %v399, 0.6931472
      %v401 = vsub.f32 %v345, %v386
      %v402 = vsub.f32 %v346, %v388
      %v403 = vsub.f32 %v347, %v390
      %v404 = vsub.f32 %v348, %v392
      %v405 = vsub.f32 %v349, %v394
      %v406 = vsub.f32 %v350, %v396
      %v407 = vsub.f32 %v351, %v398
      %v408 = vsub.f32 %v352, %v400
      %409 = vst [vmem:[%s172] sm:$0xff] %v401
      %410 = vst [vmem:[%s172 + $0x8] sm:$0xff] %v402
      %411 = vst [vmem:[%s172 + $0x10] sm:$0xff] %v403
      %412 = vst [vmem:[%s172 + $0x18] sm:$0xff] %v404
      %413 = vst [vmem:[%s172 + $0x20] sm:$0xff] %v405
      %414 = vst [vmem:[%s172 + $0x28] sm:$0xff] %v406
      %415 = vst [vmem:[%s172 + $0x30] sm:$0xff] %v407
      %416 = vst [vmem:[%s172 + $0x38] sm:$0xff] %v408
      %s417 = smul.u32 8, %s14
      %p418 = scmp.lt.s32.totalorder %s417, 15
      %s419 = scalar_select %p418, %s417, 15
      %s420 = smul.addr %s419, 8
      %s421 = scalar_lea.vmem %s3, %s420
      // Predicated region
      $region33: #{gcnii_forward.5} parent=31 // pred_check
        %p422 = pneg %p100
      $region34: #{gcnii_forward.5} parent=31 // pred_check_branch
        %424 = sbr.rel (%p422) target = $region36
      $region35: #{gcnii_forward.5} parent=31 // pred_region
        %s425 = smul.u32 8, %s14
      $region36: #{gcnii_forward.5} parent=31 // pred_fallthru
        _
    $region32: #{gcnii_forward.5} parent=5 // pred_fallthru
      _
    %p426 = scmp.le.s32.totalorder 2, %s9
    // Predicated region
    $region37: #{gcnii_forward.5} parent=5 // pred_check
      %p427 = pneg %p426
    $region38: #{gcnii_forward.5} parent=5 // pred_check_branch
      %429 = sbr.rel (%p427) target = $region40
    $region39: #{gcnii_forward.5} parent=5 // pred_region
      %s430 = ssub.s32 %s9, 2
      // Predicated region
      $region41: #{gcnii_forward.5} parent=39 // pred_check
        %p431 = pneg %p106
      $region42: #{gcnii_forward.5} parent=39 // pred_check_branch
        %433 = sbr.rel (%p431) target = $region44
      $region43: #{gcnii_forward.5} parent=39 // pred_region
        %s434 = smul.u32 8, %s15
        %p435 = scmp.lt.s32.totalorder %s434, 15
        %s436 = scalar_select %p435, %s434, 15
        %s437 = smul.addr %s436, 8
        %s438 = scalar_lea.vmem %s3, %s437
      $region44: #{gcnii_forward.5} parent=39 // pred_fallthru
        _
    $region40: #{gcnii_forward.5} parent=5 // pred_fallthru
      _
  $region6: #{gcnii_forward.5} parent=0 // loop_footer
    %s13 = sadd.s32 1, %s9
  $region7: #{gcnii_forward.5} parent=0 // loop_footer_branch
    %8 = sbr.rel target = $region3
  $region8: #{gcnii_forward.5} parent=0 // loop_exit
    _

// kernel: gcnii_forward.4
$region0: #{gcnii_forward.4}
  #allocation0 [shape = 'u32[]', space=smem, size = 0x4, offset = 0x4, fixed_abs, tag = 'smem constant byte address 0x4 - core index']
  #allocation1 [shape = 'u32[144,128]{1,0:T(1,128)}', space=vmem, size = 0x12000, scoped, tag = 'internal scratch']
  #allocation2 [shape = 'bf16[128,128]{1,0:T(16,128)(2,1)}', space=vmem, size = 0x8000, scoped, tag = 'scratch operand']
  %s0 = inlined_call_operand.vmem [shape: bf16[128,128], index: 0, kind: input, shape index: {}]
  %s1 = inlined_call_operand.vmem [shape: bf16[128,128], index: 1, kind: input, shape index: {}]
  %s2 = inlined_call_operand.vmem [shape: f32[128,128], index: 2, kind: input, shape index: {}]
  %s3 = inlined_call_operand.vmem [shape: f32[2,128,128], index: 3, kind: input, shape index: {}]
  %s4 = inlined_call_operand.vmem [shape: bf16[128,128], index: 4, kind: output, shape index: {}]
  %s5 = sld [smem:[#allocation0]]
  $region57: #{gcnii_forward.4} parent=0
    _
  %s7 = ssub.s32 1, %s5
  %s8 = scalar_select 0, %s7, %s5
  loop: start=0, step=1, limit=4
  $region2: #{gcnii_forward.4} parent=0 // loop_pre_header
    _
  $region3: #{gcnii_forward.4} parent=0 // loop_header
    %s10 = sphi 0, %s14
    %p11 = scmp.ge.s32.totalorder %s10, 4
    %s18 = sphi 0, %s18
    %s20 = sphi 0, %s18
    %s21 = sphi 0, %s20
    %s35 = sphi 0, %s21
    %s39 = sphi 0, %s39
    %s41 = sphi 0, %s39
    %s42 = sphi 0, %s41
    %s56 = sphi 0, %s42
    %s60 = sphi 0, %s60
    %s62 = sphi 0, %s60
    %s63 = sphi 0, %s62
    %s77 = sphi 0, %s63
    %s83 = sphi 0, %s85
    %s86 = sphi 0, %s83
    %s87 = sphi 0, %s86
    %s103 = sphi 0, %s87
    %s107 = sphi 0, %s107
    %s109 = sphi 0, %s107
    %s110 = sphi 0, %s109
    %s124 = sphi 0, %s110
  $region4: #{gcnii_forward.4} parent=0 // loop_header_branch
    %13 = sbr.rel (%p11) target = $region8
  $region5: #{gcnii_forward.4} parent=0 // loop_body
    %s15 = ssub.s32 %s10, 1
    %s16 = ssub.s32 %s10, 2
    %s17 = sadd.s32 %s10, 1
    %s19 = sadd.s32 %s18, 1
    %p22 = scmp.eq.s32.totalorder %s10, 1
    %p23 = scmp.ne.s32.totalorder %s18, %s20
    %p24 = scmp.eq.s32.totalorder %s10, 0
    %p25 = por %p23, %p24
    %p26 = scmp.ne.s32.totalorder %s18, %s20
    %p27 = scmp.eq.s32.totalorder %s15, 1
    %p28 = por %p26, %p27
    %p29 = scmp.ne.s32.totalorder %s20, %s21
    %p30 = scmp.eq.s32.totalorder %s15, 0
    %p31 = por %p29, %p30
    %p32 = scmp.ne.s32.totalorder %s20, %s21
    %p33 = scmp.eq.s32.totalorder %s16, 1
    %p34 = por %p32, %p33
    %p36 = scmp.ne.s32.totalorder %s21, %s35
    %p37 = scmp.eq.s32.totalorder %s16, 0
    %p38 = por %p36, %p37
    %s40 = sadd.s32 %s39, 1
    %p43 = scmp.eq.s32.totalorder %s10, 1
    %p44 = scmp.ne.s32.totalorder %s39, %s41
    %p45 = scmp.eq.s32.totalorder %s10, 0
    %p46 = por %p44, %p45
    %p47 = scmp.ne.s32.totalorder %s39, %s41
    %p48 = scmp.eq.s32.totalorder %s15, 1
    %p49 = por %p47, %p48
    %p50 = scmp.ne.s32.totalorder %s41, %s42
    %p51 = scmp.eq.s32.totalorder %s15, 0
    %p52 = por %p50, %p51
    %p53 = scmp.ne.s32.totalorder %s41, %s42
    %p54 = scmp.eq.s32.totalorder %s16, 1
    %p55 = por %p53, %p54
    %p57 = scmp.ne.s32.totalorder %s42, %s56
    %p58 = scmp.eq.s32.totalorder %s16, 0
    %p59 = por %p57, %p58
    %s61 = sadd.s32 %s60, 1
    %p64 = scmp.eq.s32.totalorder %s10, 1
    %p65 = scmp.ne.s32.totalorder %s60, %s62
    %p66 = scmp.eq.s32.totalorder %s10, 0
    %p67 = por %p65, %p66
    %p68 = scmp.ne.s32.totalorder %s60, %s62
    %p69 = scmp.eq.s32.totalorder %s15, 1
    %p70 = por %p68, %p69
    %p71 = scmp.ne.s32.totalorder %s62, %s63
    %p72 = scmp.eq.s32.totalorder %s15, 0
    %p73 = por %p71, %p72
    %p74 = scmp.ne.s32.totalorder %s62, %s63
    %p75 = scmp.eq.s32.totalorder %s16, 1
    %p76 = por %p74, %p75
    %p78 = scmp.ne.s32.totalorder %s63, %s77
    %p79 = scmp.eq.s32.totalorder %s16, 0
    %p80 = por %p78, %p79
    %s81 = ssub.s32 %s10, %s17
    %p82 = scmp.eq.s32.totalorder %s81, 0
    %s84 = sadd.s32 %s83, 1
    %s85 = scalar_select %p82, %s83, %s84
    %p88 = pneg %p82
    %p89 = scmp.eq.s32.totalorder %s10, 1
    %p90 = por %p88, %p89
    %p91 = scmp.ne.s32.totalorder %s83, %s86
    %p92 = scmp.eq.s32.totalorder %s10, 0
    %p93 = por %p91, %p92
    %p94 = scmp.ne.s32.totalorder %s83, %s86
    %p95 = scmp.eq.s32.totalorder %s15, 1
    %p96 = por %p94, %p95
    %p97 = scmp.ne.s32.totalorder %s86, %s87
    %p98 = scmp.eq.s32.totalorder %s15, 0
    %p99 = por %p97, %p98
    %p100 = scmp.ne.s32.totalorder %s86, %s87
    %p101 = scmp.eq.s32.totalorder %s16, 1
    %p102 = por %p100, %p101
    %p104 = scmp.ne.s32.totalorder %s87, %s103
    %p105 = scmp.eq.s32.totalorder %s16, 0
    %p106 = por %p104, %p105
    %s108 = sadd.s32 %s107, 1
    %p111 = scmp.eq.s32.totalorder %s10, 1
    %p112 = scmp.ne.s32.totalorder %s107, %s109
    %p113 = scmp.eq.s32.totalorder %s10, 0
    %p114 = por %p112, %p113
    %p115 = scmp.ne.s32.totalorder %s107, %s109
    %p116 = scmp.eq.s32.totalorder %s15, 1
    %p117 = por %p115, %p116
    %p118 = scmp.ne.s32.totalorder %s109, %s110
    %p119 = scmp.eq.s32.totalorder %s15, 0
    %p120 = por %p118, %p119
    %p121 = scmp.ne.s32.totalorder %s109, %s110
    %p122 = scmp.eq.s32.totalorder %s16, 1
    %p123 = por %p121, %p122
    %p125 = scmp.ne.s32.totalorder %s110, %s124
    %p126 = scmp.eq.s32.totalorder %s16, 0
    %p127 = por %p125, %p126
    %p128 = scmp.le.s32.totalorder 1, %s10
    %p129 = scmp.lt.s32.totalorder %s10, 3
    %p130 = pnand %p128, %p129
    %p131 = pneg %p130
    // Predicated region
    $region9: #{gcnii_forward.4} parent=5 // pred_check
      _
    $region10: #{gcnii_forward.4} parent=5 // pred_check_branch
      %133 = sbr.rel (%p130) target = $region12
    $region11: #{gcnii_forward.4} parent=5 // pred_region
      %s134 = ssub.s32 %s10, 1
      // Predicated region
      $region13: #{gcnii_forward.4} parent=11 // pred_check
        %p135 = pneg %p31
      $region14: #{gcnii_forward.4} parent=11 // pred_check_branch
        %137 = sbr.rel (%p135) target = $region16
      $region15: #{gcnii_forward.4} parent=11 // pred_region
        _
      $region16: #{gcnii_forward.4} parent=11 // pred_fallthru
        _
      // Predicated region
      $region17: #{gcnii_forward.4} parent=11 // pred_check
        %p138 = pneg %p52
      $region18: #{gcnii_forward.4} parent=11 // pred_check_branch
        %140 = sbr.rel (%p138) target = $region20
      $region19: #{gcnii_forward.4} parent=11 // pred_region
        _
      $region20: #{gcnii_forward.4} parent=11 // pred_fallthru
        _
      // Predicated region
      $region21: #{gcnii_forward.4} parent=11 // pred_check
        %p141 = pneg %p73
      $region22: #{gcnii_forward.4} parent=11 // pred_check_branch
        %143 = sbr.rel (%p141) target = $region24
      $region23: #{gcnii_forward.4} parent=11 // pred_region
        _
      $region24: #{gcnii_forward.4} parent=11 // pred_fallthru
        _
    $region12: #{gcnii_forward.4} parent=5 // pred_fallthru
      _
    %p144 = scmp.lt.s32.totalorder %s10, 2
    // Predicated region
    $region25: #{gcnii_forward.4} parent=5 // pred_check
      %p145 = pneg %p144
    $region26: #{gcnii_forward.4} parent=5 // pred_check_branch
      %147 = sbr.rel (%p145) target = $region28
    $region27: #{gcnii_forward.4} parent=5 // pred_region
      // Predicated region
      $region29: #{gcnii_forward.4} parent=27 // pred_check
        %p148 = pneg %p93
      $region30: #{gcnii_forward.4} parent=27 // pred_check_branch
        %150 = sbr.rel (%p148) target = $region32
      $region31: #{gcnii_forward.4} parent=27 // pred_region
        %p151 = scmp.lt.s32.totalorder %s10, 1
        %s152 = scalar_select %p151, %s10, 1
        %s153 = smul.addr %s152, 16
        %s154 = smul.addr %s153, 8
        %s155 = scalar_lea.vmem %s3, %s154
      $region32: #{gcnii_forward.4} parent=27 // pred_fallthru
        _
    $region28: #{gcnii_forward.4} parent=5 // pred_fallthru
      _
    %p156 = scmp.le.s32.totalorder 1, %s10
    %p157 = scmp.lt.s32.totalorder %s10, 3
    %p158 = pnand %p156, %p157
    %p159 = pneg %p158
    // Predicated region
    $region33: #{gcnii_forward.4} parent=5 // pred_check
      _
    $region34: #{gcnii_forward.4} parent=5 // pred_check_branch
      %161 = sbr.rel (%p158) target = $region36
    $region35: #{gcnii_forward.4} parent=5 // pred_region
      %s162 = ssub.s32 %s10, 1
      %p163 = pneg %p31
      %p164 = pneg %p28
      %p165 = pneg %p52
      %p166 = pneg %p49
      %p167 = pneg %p73
      %p168 = pneg %p70
      %p169 = scmp.lt.s32.totalorder %s15, 1
      %s170 = scalar_select %p169, %s15, 1
      %s171 = smul.addr %s170, 16
      %s172 = smul.addr %s171, 8
      %s173 = scalar_lea.vmem %s3, %s172
      %p174 = pneg %p99
      %p175 = pneg %p96
      %p176 = pneg %p120
      %p177 = pneg %p117
      %p178 = scmp.lt.s32.totalorder %s15, 1
      %s179 = scalar_select %p178, %s15, 1
      %s180 = smul.addr %s179, 16
      %s181 = smul.addr %s180, 8
      %s182 = scalar_lea.vmem %s3, %s181
      %p184 = scmp.eq.s32.totalorder %s15, 0
      // Predicated region
      $region37: #{gcnii_forward.4} parent=35 // pred_check
        %p185 = pneg %p184
      $region38: #{gcnii_forward.4} parent=35 // pred_check_branch
        %187 = sbr.rel (%p185) target = $region40
      $region39: #{gcnii_forward.4} parent=35 // pred_region
        %v188 = vld [vmem:[%s1] sm:$0xf]
        %v189 = vld [vmem:[%s1 + $0x4] sm:$0xf]
        %v190 = vld [vmem:[%s1 + $0x8] sm:$0xf]
        %v191 = vld [vmem:[%s1 + $0xc] sm:$0xf]
        %v192 = vld [vmem:[%s1 + $0x10] sm:$0xf]
        %v193 = vld [vmem:[%s1 + $0x14] sm:$0xf]
        %v194 = vld [vmem:[%s1 + $0x18] sm:$0xf]
        %v195 = vld [vmem:[%s1 + $0x1c] sm:$0xf]
        %v196 = vld [vmem:[%s1 + $0x20] sm:$0xf]
        %v197 = vld [vmem:[%s1 + $0x24] sm:$0xf]
        %v198 = vld [vmem:[%s1 + $0x28] sm:$0xf]
        %v199 = vld [vmem:[%s1 + $0x2c] sm:$0xf]
        %v200 = vld [vmem:[%s1 + $0x30] sm:$0xf]
        %v201 = vld [vmem:[%s1 + $0x34] sm:$0xf]
        %v202 = vld [vmem:[%s1 + $0x38] sm:$0xf]
        %v203 = vld [vmem:[%s1 + $0x3c] sm:$0xf]
        %v220 = vunpack.c.l.b16 %v188
        %v221 = vunpack.c.l.b16 %v189
        %v222 = vunpack.c.l.b16 %v190
        %v223 = vunpack.c.l.b16 %v191
        %v224 = vunpack.c.l.b16 %v192
        %v225 = vunpack.c.l.b16 %v193
        %v226 = vunpack.c.l.b16 %v194
        %v227 = vunpack.c.l.b16 %v195
        %v228 = vunpack.c.l.b16 %v196
        %v229 = vunpack.c.l.b16 %v197
        %v230 = vunpack.c.l.b16 %v198
        %v231 = vunpack.c.l.b16 %v199
        %v232 = vunpack.c.l.b16 %v200
        %v233 = vunpack.c.l.b16 %v201
        %v234 = vunpack.c.l.b16 %v202
        %v235 = vunpack.c.l.b16 %v203
        %v236 = vpack.c.b16 %v221, %v220
        %v237 = vpack.c.b16 %v223, %v222
        %v238 = vpack.c.b16 %v225, %v224
        %v239 = vpack.c.b16 %v227, %v226
        %v240 = vpack.c.b16 %v229, %v228
        %v241 = vpack.c.b16 %v231, %v230
        %v242 = vpack.c.b16 %v233, %v232
        %v243 = vpack.c.b16 %v235, %v234
        %252 = vst [vmem:[#allocation2] sm:$0xff] %v236
        %253 = vst [vmem:[#allocation2 + $0x8] sm:$0xff] %v237
        %254 = vst [vmem:[#allocation2 + $0x10] sm:$0xff] %v238
        %255 = vst [vmem:[#allocation2 + $0x18] sm:$0xff] %v239
        %256 = vst [vmem:[#allocation2 + $0x20] sm:$0xff] %v240
        %257 = vst [vmem:[#allocation2 + $0x28] sm:$0xff] %v241
        %258 = vst [vmem:[#allocation2 + $0x30] sm:$0xff] %v242
        %259 = vst [vmem:[#allocation2 + $0x38] sm:$0xff] %v243
      $region40: #{gcnii_forward.4} parent=35 // pred_fallthru
        _
      %v260 = vld [vmem:[%s0] sm:$0xf]
      %v261 = vld [vmem:[%s0 + $0x4] sm:$0xf]
      %v262 = vld [vmem:[%s0 + $0x8] sm:$0xf]
      %v263 = vld [vmem:[%s0 + $0xc] sm:$0xf]
      %v264 = vld [vmem:[%s0 + $0x10] sm:$0xf]
      %v265 = vld [vmem:[%s0 + $0x14] sm:$0xf]
      %v266 = vld [vmem:[%s0 + $0x18] sm:$0xf]
      %v267 = vld [vmem:[%s0 + $0x1c] sm:$0xf]
      %v268 = vld [vmem:[%s0 + $0x20] sm:$0xf]
      %v269 = vld [vmem:[%s0 + $0x24] sm:$0xf]
      %v270 = vld [vmem:[%s0 + $0x28] sm:$0xf]
      %v271 = vld [vmem:[%s0 + $0x2c] sm:$0xf]
      %v272 = vld [vmem:[%s0 + $0x30] sm:$0xf]
      %v273 = vld [vmem:[%s0 + $0x34] sm:$0xf]
      %v274 = vld [vmem:[%s0 + $0x38] sm:$0xf]
      %v275 = vld [vmem:[%s0 + $0x3c] sm:$0xf]
      %v276 = vld [vmem:[#allocation2] sm:$0xff]
      %v277 = vld [vmem:[#allocation2 + $0x8] sm:$0xff]
      %v278 = vld [vmem:[#allocation2 + $0x10] sm:$0xff]
      %v279 = vld [vmem:[#allocation2 + $0x18] sm:$0xff]
      %v280 = vld [vmem:[#allocation2 + $0x20] sm:$0xff]
      %v281 = vld [vmem:[#allocation2 + $0x28] sm:$0xff]
      %v282 = vld [vmem:[#allocation2 + $0x30] sm:$0xff]
      %v283 = vld [vmem:[#allocation2 + $0x38] sm:$0xff]
      %v300 = vunpack.c.l.b16 %v260
      %v301 = vunpack.c.l.b16 %v261
      %v302 = vunpack.c.l.b16 %v262
      %v303 = vunpack.c.l.b16 %v263
      %v304 = vunpack.c.l.b16 %v264
      %v305 = vunpack.c.l.b16 %v265
      %v306 = vunpack.c.l.b16 %v266
      %v307 = vunpack.c.l.b16 %v267
      %v308 = vunpack.c.l.b16 %v268
      %v309 = vunpack.c.l.b16 %v269
      %v310 = vunpack.c.l.b16 %v270
      %v311 = vunpack.c.l.b16 %v271
      %v312 = vunpack.c.l.b16 %v272
      %v313 = vunpack.c.l.b16 %v273
      %v314 = vunpack.c.l.b16 %v274
      %v315 = vunpack.c.l.b16 %v275
      %v316 = vpack.c.b16 %v301, %v300
      %v317 = vpack.c.b16 %v303, %v302
      %v318 = vpack.c.b16 %v305, %v304
      %v319 = vpack.c.b16 %v307, %v306
      %v320 = vpack.c.b16 %v309, %v308
      %v321 = vpack.c.b16 %v311, %v310
      %v322 = vpack.c.b16 %v313, %v312
      %v323 = vpack.c.b16 %v315, %v314
      %332 = vmatprep.subr.bf16.mxu0 0
      %333 = vmatpush1.bf16.msra.mxu0 %v276
      %334 = vmatprep.subr.bf16.mxu0 0
      %335 = vmatpush1.bf16.msra.mxu0 %v277
      %336 = vmatprep.subr.bf16.mxu0 0
      %337 = vmatpush1.bf16.msra.mxu0 %v278
      %338 = vmatprep.subr.bf16.mxu0 0
      %339 = vmatpush1.bf16.msra.mxu0 %v279
      %340 = vmatprep.subr.bf16.mxu0 0
      %341 = vmatpush1.bf16.msra.mxu0 %v280
      %342 = vmatprep.subr.bf16.mxu0 0
      %343 = vmatpush1.bf16.msra.mxu0 %v281
      %344 = vmatprep.subr.bf16.mxu0 0
      %345 = vmatpush1.bf16.msra.mxu0 %v282
      %346 = vmatprep.subr.bf16.mxu0 0
      %347 = vmatpush1.bf16.msra.mxu0 %v283
      %348 = vmatprep.subr.bf16.mxu0 0
      %349 = vmatpush1.bf16.msra.mxu0 0
      %350 = vmatprep.subr.bf16.mxu0 0
      %351 = vmatpush1.bf16.msra.mxu0 0
      %352 = vmatprep.subr.bf16.mxu0 0
      %353 = vmatpush1.bf16.msra.mxu0 0
      %354 = vmatprep.subr.bf16.mxu0 0
      %355 = vmatpush1.bf16.msra.mxu0 0
      %356 = vmatprep.subr.bf16.mxu0 0
      %357 = vmatpush1.bf16.msra.mxu0 0
      %358 = vmatprep.subr.bf16.mxu0 0
      %359 = vmatpush1.bf16.msra.mxu0 0
      %360 = vmatprep.subr.bf16.mxu0 0
      %361 = vmatpush1.bf16.msra.mxu0 0
      %362 = vmatprep.subr.bf16.mxu0 0
      %363 = vmatpush1.bf16.msra.mxu0 0
      %364 = vmatprep.mubr.bf16.mxu0 0
      %365 = vmatmul.mubr.bf16.gmra.mrb[0].mxu0 %v316
      %v366 = vpop.f32.mrb[0].mxu0
      %v367 = vadd.f32 0.0, %v366
      %v368 = vpop.f32.mrb[0].mxu0
      %v369 = vpop.f32.mrb[0].mxu0
      %v370 = vadd.f32 0.0, %v369
      %v371 = vpop.f32.mrb[0].mxu0
      %372 = vmatprep.mubr.bf16.mxu0 0
      %373 = vmatmul.mubr.bf16.gmra.mrb[0].mxu0 %v317
      %v374 = vpop.f32.mrb[0].mxu0
      %v375 = vadd.f32 0.0, %v374
      %v376 = vpop.f32.mrb[0].mxu0
      %v377 = vpop.f32.mrb[0].mxu0
      %v378 = vadd.f32 0.0, %v377
      %v379 = vpop.f32.mrb[0].mxu0
      %380 = vmatprep.mubr.bf16.mxu0 0
      %381 = vmatmul.mubr.bf16.gmra.mrb[0].mxu0 %v318
      %v382 = vpop.f32.mrb[0].mxu0
      %v383 = vadd.f32 0.0, %v382
      %v384 = vpop.f32.mrb[0].mxu0
      %v385 = vpop.f32.mrb[0].mxu0
      %v386 = vadd.f32 0.0, %v385
      %v387 = vpop.f32.mrb[0].mxu0
      %388 = vmatprep.mubr.bf16.mxu0 0
      %389 = vmatmul.mubr.bf16.gmra.mrb[0].mxu0 %v319
      %v390 = vpop.f32.mrb[0].mxu0
      %v391 = vadd.f32 0.0, %v390
      %v392 = vpop.f32.mrb[0].mxu0
      %v393 = vpop.f32.mrb[0].mxu0
      %v394 = vadd.f32 0.0, %v393
      %v395 = vpop.f32.mrb[0].mxu0
      %396 = vmatprep.mubr.bf16.mxu0 0
      %397 = vmatmul.mubr.bf16.gmra.mrb[0].mxu0 %v320
      %v398 = vpop.f32.mrb[0].mxu0
      %v399 = vadd.f32 0.0, %v398
      %v400 = vpop.f32.mrb[0].mxu0
      %v401 = vpop.f32.mrb[0].mxu0
      %v402 = vadd.f32 0.0, %v401
      %v403 = vpop.f32.mrb[0].mxu0
      %404 = vmatprep.mubr.bf16.mxu0 0
      %405 = vmatmul.mubr.bf16.gmra.mrb[0].mxu0 %v321
      %v406 = vpop.f32.mrb[0].mxu0
      %v407 = vadd.f32 0.0, %v406
      %v408 = vpop.f32.mrb[0].mxu0
      %v409 = vpop.f32.mrb[0].mxu0
      %v410 = vadd.f32 0.0, %v409
      %v411 = vpop.f32.mrb[0].mxu0
      %412 = vmatprep.mubr.bf16.mxu0 0
      %413 = vmatmul.mubr.bf16.gmra.mrb[0].mxu0 %v322
      %v414 = vpop.f32.mrb[0].mxu0
      %v415 = vadd.f32 0.0, %v414
      %v416 = vpop.f32.mrb[0].mxu0
      %v417 = vpop.f32.mrb[0].mxu0
      %v418 = vadd.f32 0.0, %v417
      %v419 = vpop.f32.mrb[0].mxu0
      %420 = vmatprep.mubr.bf16.mxu0 0
      %421 = vmatmul.mubr.bf16.gmra.mrb[0].mxu0 %v323
      %v422 = vpop.f32.mrb[0].mxu0
      %v423 = vadd.f32 0.0, %v422
      %v424 = vpop.f32.mrb[0].mxu0
      %v425 = vpop.f32.mrb[0].mxu0
      %v426 = vadd.f32 0.0, %v425
      %v427 = vpop.f32.mrb[0].mxu0
      %428 = vdwg.mxu0
      %v429 = vmul.f32 %v367, 0.9
      %v430 = vmul.f32 %v370, 0.9
      %v431 = vmul.f32 %v375, 0.9
      %v432 = vmul.f32 %v378, 0.9
      %v433 = vmul.f32 %v383, 0.9
      %v434 = vmul.f32 %v386, 0.9
      %v435 = vmul.f32 %v391, 0.9
      %v436 = vmul.f32 %v394, 0.9
      %v437 = vmul.f32 %v399, 0.9
      %v438 = vmul.f32 %v402, 0.9
      %v439 = vmul.f32 %v407, 0.9
      %v440 = vmul.f32 %v410, 0.9
      %v441 = vmul.f32 %v415, 0.9
      %v442 = vmul.f32 %v418, 0.9
      %v443 = vmul.f32 %v423, 0.9
      %v444 = vmul.f32 %v426, 0.9
      %v445 = vld [vmem:[%s2] sm:$0xff]
      %v446 = vld [vmem:[%s2 + $0x8] sm:$0xff]
      %v447 = vld [vmem:[%s2 + $0x10] sm:$0xff]
      %v448 = vld [vmem:[%s2 + $0x18] sm:$0xff]
      %v449 = vld [vmem:[%s2 + $0x20] sm:$0xff]
      %v450 = vld [vmem:[%s2 + $0x28] sm:$0xff]
      %v451 = vld [vmem:[%s2 + $0x30] sm:$0xff]
      %v452 = vld [vmem:[%s2 + $0x38] sm:$0xff]
      %v453 = vld [vmem:[%s2 + $0x40] sm:$0xff]
      %v454 = vld [vmem:[%s2 + $0x48] sm:$0xff]
      %v455 = vld [vmem:[%s2 + $0x50] sm:$0xff]
      %v456 = vld [vmem:[%s2 + $0x58] sm:$0xff]
      %v457 = vld [vmem:[%s2 + $0x60] sm:$0xff]
      %v458 = vld [vmem:[%s2 + $0x68] sm:$0xff]
      %v459 = vld [vmem:[%s2 + $0x70] sm:$0xff]
      %v460 = vld [vmem:[%s2 + $0x78] sm:$0xff]
      %v461 = vmul.f32 %v445, 0.1
      %v462 = vmul.f32 %v446, 0.1
      %v463 = vmul.f32 %v447, 0.1
      %v464 = vmul.f32 %v448, 0.1
      %v465 = vmul.f32 %v449, 0.1
      %v466 = vmul.f32 %v450, 0.1
      %v467 = vmul.f32 %v451, 0.1
      %v468 = vmul.f32 %v452, 0.1
      %v469 = vmul.f32 %v453, 0.1
      %v470 = vmul.f32 %v454, 0.1
      %v471 = vmul.f32 %v455, 0.1
      %v472 = vmul.f32 %v456, 0.1
      %v473 = vmul.f32 %v457, 0.1
      %v474 = vmul.f32 %v458, 0.1
      %v475 = vmul.f32 %v459, 0.1
      %v476 = vmul.f32 %v460, 0.1
      %v477 = vadd.f32 %v429, %v461
      %v478 = vadd.f32 %v430, %v462
      %v479 = vadd.f32 %v431, %v463
      %v480 = vadd.f32 %v432, %v464
      %v481 = vadd.f32 %v433, %v465
      %v482 = vadd.f32 %v434, %v466
      %v483 = vadd.f32 %v435, %v467
      %v484 = vadd.f32 %v436, %v468
      %v485 = vadd.f32 %v437, %v469
      %v486 = vadd.f32 %v438, %v470
      %v487 = vadd.f32 %v439, %v471
      %v488 = vadd.f32 %v440, %v472
      %v489 = vadd.f32 %v441, %v473
      %v490 = vadd.f32 %v442, %v474
      %v491 = vadd.f32 %v443, %v475
      %v492 = vadd.f32 %v444, %v476
      %v493 = vld [vmem:[%s182] sm:$0xff]
      %v494 = vld [vmem:[%s182 + $0x8] sm:$0xff]
      %v495 = vld [vmem:[%s182 + $0x10] sm:$0xff]
      %v496 = vld [vmem:[%s182 + $0x18] sm:$0xff]
      %v497 = vld [vmem:[%s182 + $0x20] sm:$0xff]
      %v498 = vld [vmem:[%s182 + $0x28] sm:$0xff]
      %v499 = vld [vmem:[%s182 + $0x30] sm:$0xff]
      %v500 = vld [vmem:[%s182 + $0x38] sm:$0xff]
      %v501 = vld [vmem:[%s182 + $0x40] sm:$0xff]
      %v502 = vld [vmem:[%s182 + $0x48] sm:$0xff]
      %v503 = vld [vmem:[%s182 + $0x50] sm:$0xff]
      %v504 = vld [vmem:[%s182 + $0x58] sm:$0xff]
      %v505 = vld [vmem:[%s182 + $0x60] sm:$0xff]
      %v506 = vld [vmem:[%s182 + $0x68] sm:$0xff]
      %v507 = vld [vmem:[%s182 + $0x70] sm:$0xff]
      %v508 = vld [vmem:[%s182 + $0x78] sm:$0xff]
      %509 = vmatprep.subr.mxu0 0.0
      %510 = vmatpush1.msra.mxu0 %v493
      %511 = vmatprep.subr.mxu0 0.0
      %512 = vmatpush1.msra.mxu0 %v494
      %513 = vmatprep.subr.mxu0 0.0
      %514 = vmatpush1.msra.mxu0 %v495
      %515 = vmatprep.subr.mxu0 0.0
      %516 = vmatpush1.msra.mxu0 %v496
      %517 = vmatprep.subr.mxu0 0.0
      %518 = vmatpush1.msra.mxu0 %v497
      %519 = vmatprep.subr.mxu0 0.0
      %520 = vmatpush1.msra.mxu0 %v498
      %521 = vmatprep.subr.mxu0 0.0
      %522 = vmatpush1.msra.mxu0 %v499
      %523 = vmatprep.subr.mxu0 0.0
      %524 = vmatpush1.msra.mxu0 %v500
      %525 = vmatprep.subr.mxu0 0.0
      %526 = vmatpush1.msra.mxu0 %v501
      %527 = vmatprep.subr.mxu0 0.0
      %528 = vmatpush1.msra.mxu0 %v502
      %529 = vmatprep.subr.mxu0 0.0
      %530 = vmatpush1.msra.mxu0 %v503
      %531 = vmatprep.subr.mxu0 0.0
      %532 = vmatpush1.msra.mxu0 %v504
      %533 = vmatprep.subr.mxu0 0.0
      %534 = vmatpush1.msra.mxu0 %v505
      %535 = vmatprep.subr.mxu0 0.0
      %536 = vmatpush1.msra.mxu0 %v506
      %537 = vmatprep.subr.mxu0 0.0
      %538 = vmatpush1.msra.mxu0 %v507
      %539 = vmatprep.subr.mxu0 0.0
      %540 = vmatpush1.msra.mxu0 %v508
      %541 = vmatprep.subr.mxu0 0.0
      %542 = vmatpush1.msra.mxu0 0.0
      %543 = vmatprep.subr.mxu0 0.0
      %544 = vmatpush1.msra.mxu0 0.0
      %545 = vmatprep.subr.mxu0 0.0
      %546 = vmatpush1.msra.mxu0 0.0
      %547 = vmatprep.subr.mxu0 0.0
      %548 = vmatpush1.msra.mxu0 0.0
      %549 = vmatprep.subr.mxu0 0.0
      %550 = vmatpush1.msra.mxu0 0.0
      %551 = vmatprep.subr.mxu0 0.0
      %552 = vmatpush1.msra.mxu0 0.0
      %553 = vmatprep.subr.mxu0 0.0
      %554 = vmatpush1.msra.mxu0 0.0
      %555 = vmatprep.subr.mxu0 0.0
      %556 = vmatpush1.msra.mxu0 0.0
      %557 = vmatprep.subr.mxu0 0.0
      %558 = vmatpush1.msra.mxu0 0.0
      %559 = vmatprep.subr.mxu0 0.0
      %560 = vmatpush1.msra.mxu0 0.0
      %561 = vmatprep.subr.mxu0 0.0
      %562 = vmatpush1.msra.mxu0 0.0
      %563 = vmatprep.subr.mxu0 0.0
      %564 = vmatpush1.msra.mxu0 0.0
      %565 = vmatprep.subr.mxu0 0.0
      %566 = vmatpush1.msra.mxu0 0.0
      %567 = vmatprep.subr.mxu0 0.0
      %568 = vmatpush1.msra.mxu0 0.0
      %569 = vmatprep.subr.mxu0 0.0
      %570 = vmatpush1.msra.mxu0 0.0
      %571 = vmatprep.subr.mxu0 0.0
      %572 = vmatpush1.msra.mxu0 0.0
      %573 = vmatprep.mubr.f32.mxu0 0.0
      %574 = vmatmul.mubr.f32.gmra.mrb[0].mxu0 %v477
      %v575 = vpop.f32.mrb[0].mxu0
      %v576 = vadd.f32 0.0, %v575
      %v577 = vpop.f32.mrb[0].mxu0
      %578 = vmatprep.mubr.f32.mxu0 0.0
      %579 = vmatmul.mubr.f32.gmra.mrb[0].mxu0 %v478
      %v580 = vpop.f32.mrb[0].mxu0
      %v581 = vadd.f32 0.0, %v580
      %v582 = vpop.f32.mrb[0].mxu0
      %583 = vmatprep.mubr.f32.mxu0 0.0
      %584 = vmatmul.mubr.f32.gmra.mrb[0].mxu0 %v479
      %v585 = vpop.f32.mrb[0].mxu0
      %v586 = vadd.f32 0.0, %v585
      %v587 = vpop.f32.mrb[0].mxu0
      %588 = vmatprep.mubr.f32.mxu0 0.0
      %589 = vmatmul.mubr.f32.gmra.mrb[0].mxu0 %v480
      %v590 = vpop.f32.mrb[0].mxu0
      %v591 = vadd.f32 0.0, %v590
      %v592 = vpop.f32.mrb[0].mxu0
      %593 = vmatprep.mubr.f32.mxu0 0.0
      %594 = vmatmul.mubr.f32.gmra.mrb[0].mxu0 %v481
      %v595 = vpop.f32.mrb[0].mxu0
      %v596 = vadd.f32 0.0, %v595
      %v597 = vpop.f32.mrb[0].mxu0
      %598 = vmatprep.mubr.f32.mxu0 0.0
      %599 = vmatmul.mubr.f32.gmra.mrb[0].mxu0 %v482
      %v600 = vpop.f32.mrb[0].mxu0
      %v601 = vadd.f32 0.0, %v600
      %v602 = vpop.f32.mrb[0].mxu0
      %603 = vmatprep.mubr.f32.mxu0 0.0
      %604 = vmatmul.mubr.f32.gmra.mrb[0].mxu0 %v483
      %v605 = vpop.f32.mrb[0].mxu0
      %v606 = vadd.f32 0.0, %v605
      %v607 = vpop.f32.mrb[0].mxu0
      %608 = vmatprep.mubr.f32.mxu0 0.0
      %609 = vmatmul.mubr.f32.gmra.mrb[0].mxu0 %v484
      %v610 = vpop.f32.mrb[0].mxu0
      %v611 = vadd.f32 0.0, %v610
      %v612 = vpop.f32.mrb[0].mxu0
      %613 = vmatprep.mubr.f32.mxu0 0.0
      %614 = vmatmul.mubr.f32.gmra.mrb[0].mxu0 %v485
      %v615 = vpop.f32.mrb[0].mxu0
      %v616 = vadd.f32 0.0, %v615
      %v617 = vpop.f32.mrb[0].mxu0
      %618 = vmatprep.mubr.f32.mxu0 0.0
      %619 = vmatmul.mubr.f32.gmra.mrb[0].mxu0 %v486
      %v620 = vpop.f32.mrb[0].mxu0
      %v621 = vadd.f32 0.0, %v620
      %v622 = vpop.f32.mrb[0].mxu0
      %623 = vmatprep.mubr.f32.mxu0 0.0
      %624 = vmatmul.mubr.f32.gmra.mrb[0].mxu0 %v487
      %v625 = vpop.f32.mrb[0].mxu0
      %v626 = vadd.f32 0.0, %v625
      %v627 = vpop.f32.mrb[0].mxu0
      %628 = vmatprep.mubr.f32.mxu0 0.0
      %629 = vmatmul.mubr.f32.gmra.mrb[0].mxu0 %v488
      %v630 = vpop.f32.mrb[0].mxu0
      %v631 = vadd.f32 0.0, %v630
      %v632 = vpop.f32.mrb[0].mxu0
      %633 = vmatprep.mubr.f32.mxu0 0.0
      %634 = vmatmul.mubr.f32.gmra.mrb[0].mxu0 %v489
      %v635 = vpop.f32.mrb[0].mxu0
      %v636 = vadd.f32 0.0, %v635
      %v637 = vpop.f32.mrb[0].mxu0
      %638 = vmatprep.mubr.f32.mxu0 0.0
      %639 = vmatmul.mubr.f32.gmra.mrb[0].mxu0 %v490
      %v640 = vpop.f32.mrb[0].mxu0
      %v641 = vadd.f32 0.0, %v640
      %v642 = vpop.f32.mrb[0].mxu0
      %643 = vmatprep.mubr.f32.mxu0 0.0
      %644 = vmatmul.mubr.f32.gmra.mrb[0].mxu0 %v491
      %v645 = vpop.f32.mrb[0].mxu0
      %v646 = vadd.f32 0.0, %v645
      %v647 = vpop.f32.mrb[0].mxu0
      %648 = vmatprep.mubr.f32.mxu0 0.0
      %649 = vmatmul.mubr.f32.gmra.mrb[0].mxu0 %v492
      %v650 = vpop.f32.mrb[0].mxu0
      %v651 = vadd.f32 0.0, %v650
      %v652 = vpop.f32.mrb[0].mxu0
      %653 = vdwg.mxu0
      %v654 = vmax.f32 %v576, 0.0
      %v655 = vmax.f32 %v581, 0.0
      %v656 = vmax.f32 %v586, 0.0
      %v657 = vmax.f32 %v591, 0.0
      %v658 = vmax.f32 %v596, 0.0
      %v659 = vmax.f32 %v601, 0.0
      %v660 = vmax.f32 %v606, 0.0
      %v661 = vmax.f32 %v611, 0.0
      %v662 = vmax.f32 %v616, 0.0
      %v663 = vmax.f32 %v621, 0.0
      %v664 = vmax.f32 %v626, 0.0
      %v665 = vmax.f32 %v631, 0.0
      %v666 = vmax.f32 %v636, 0.0
      %v667 = vmax.f32 %v641, 0.0
      %v668 = vmax.f32 %v646, 0.0
      %v669 = vmax.f32 %v651, 0.0
      %v670 = vpack.c.bf16 %v655, %v654
      %v671 = vpack.c.bf16 %v657, %v656
      %v672 = vpack.c.bf16 %v659, %v658
      %v673 = vpack.c.bf16 %v661, %v660
      %v674 = vpack.c.bf16 %v663, %v662
      %v675 = vpack.c.bf16 %v665, %v664
      %v676 = vpack.c.bf16 %v667, %v666
      %v677 = vpack.c.bf16 %v669, %v668
      %678 = vst [vmem:[#allocation2] sm:$0xff] %v670
      %679 = vst [vmem:[#allocation2 + $0x8] sm:$0xff] %v671
      %680 = vst [vmem:[#allocation2 + $0x10] sm:$0xff] %v672
      %681 = vst [vmem:[#allocation2 + $0x18] sm:$0xff] %v673
      %682 = vst [vmem:[#allocation2 + $0x20] sm:$0xff] %v674
      %683 = vst [vmem:[#allocation2 + $0x28] sm:$0xff] %v675
      %684 = vst [vmem:[#allocation2 + $0x30] sm:$0xff] %v676
      %685 = vst [vmem:[#allocation2 + $0x38] sm:$0xff] %v677
      %p686 = scmp.eq.s32.totalorder %s15, 1
      // Predicated region
      $region41: #{gcnii_forward.4} parent=35 // pred_check
        %p687 = pneg %p686
      $region42: #{gcnii_forward.4} parent=35 // pred_check_branch
        %689 = sbr.rel (%p687) target = $region44
      $region43: #{gcnii_forward.4} parent=35 // pred_region
        %v690 = vld [vmem:[#allocation2] sm:$0xff]
        %v691 = vld [vmem:[#allocation2 + $0x8] sm:$0xff]
        %v692 = vld [vmem:[#allocation2 + $0x10] sm:$0xff]
        %v693 = vld [vmem:[#allocation2 + $0x18] sm:$0xff]
        %v694 = vld [vmem:[#allocation2 + $0x20] sm:$0xff]
        %v695 = vld [vmem:[#allocation2 + $0x28] sm:$0xff]
        %v696 = vld [vmem:[#allocation2 + $0x30] sm:$0xff]
        %v697 = vld [vmem:[#allocation2 + $0x38] sm:$0xff]
        %v706 = vunpack.c.l.b16 %v690
        %v707 = vunpack.c.h.b16 %v690
        %v708 = vunpack.c.l.b16 %v691
        %v709 = vunpack.c.h.b16 %v691
        %v710 = vunpack.c.l.b16 %v692
        %v711 = vunpack.c.h.b16 %v692
        %v712 = vunpack.c.l.b16 %v693
        %v713 = vunpack.c.h.b16 %v693
        %v714 = vunpack.c.l.b16 %v694
        %v715 = vunpack.c.h.b16 %v694
        %v716 = vunpack.c.l.b16 %v695
        %v717 = vunpack.c.h.b16 %v695
        %v718 = vunpack.c.l.b16 %v696
        %v719 = vunpack.c.h.b16 %v696
        %v720 = vunpack.c.l.b16 %v697
        %v721 = vunpack.c.h.b16 %v697
        %v722 = vpack.c.b16 %v706, %v706
        %v723 = vpack.c.b16 %v707, %v707
        %v724 = vpack.c.b16 %v708, %v708
        %v725 = vpack.c.b16 %v709, %v709
        %v726 = vpack.c.b16 %v710, %v710
        %v727 = vpack.c.b16 %v711, %v711
        %v728 = vpack.c.b16 %v712, %v712
        %v729 = vpack.c.b16 %v713, %v713
        %v730 = vpack.c.b16 %v714, %v714
        %v731 = vpack.c.b16 %v715, %v715
        %v732 = vpack.c.b16 %v716, %v716
        %v733 = vpack.c.b16 %v717, %v717
        %v734 = vpack.c.b16 %v718, %v718
        %v735 = vpack.c.b16 %v719, %v719
        %v736 = vpack.c.b16 %v720, %v720
        %v737 = vpack.c.b16 %v721, %v721
        %754 = vst [vmem:[%s4] sm:$0xf] %v722
        %755 = vst [vmem:[%s4 + $0x4] sm:$0xf] %v723
        %756 = vst [vmem:[%s4 + $0x8] sm:$0xf] %v724
        %757 = vst [vmem:[%s4 + $0xc] sm:$0xf] %v725
        %758 = vst [vmem:[%s4 + $0x10] sm:$0xf] %v726
        %759 = vst [vmem:[%s4 + $0x14] sm:$0xf] %v727
        %760 = vst [vmem:[%s4 + $0x18] sm:$0xf] %v728
        %761 = vst [vmem:[%s4 + $0x1c] sm:$0xf] %v729
        %762 = vst [vmem:[%s4 + $0x20] sm:$0xf] %v730
        %763 = vst [vmem:[%s4 + $0x24] sm:$0xf] %v731
        %764 = vst [vmem:[%s4 + $0x28] sm:$0xf] %v732
        %765 = vst [vmem:[%s4 + $0x2c] sm:$0xf] %v733
        %766 = vst [vmem:[%s4 + $0x30] sm:$0xf] %v734
        %767 = vst [vmem:[%s4 + $0x34] sm:$0xf] %v735
        %768 = vst [vmem:[%s4 + $0x38] sm:$0xf] %v736
        %769 = vst [vmem:[%s4 + $0x3c] sm:$0xf] %v737
      $region44: #{gcnii_forward.4} parent=35 // pred_fallthru
        _
      // Predicated region
      $region45: #{gcnii_forward.4} parent=35 // pred_check
        %p770 = pneg %p117
      $region46: #{gcnii_forward.4} parent=35 // pred_check_branch
        %772 = sbr.rel (%p770) target = $region48
      $region47: #{gcnii_forward.4} parent=35 // pred_region
        _
      $region48: #{gcnii_forward.4} parent=35 // pred_fallthru
        _
      // Predicated region
      $region49: #{gcnii_forward.4} parent=35 // pred_check
        %p773 = pneg %p117
      $region50: #{gcnii_forward.4} parent=35 // pred_check_branch
        %775 = sbr.rel (%p773) target = $region52
      $region51: #{gcnii_forward.4} parent=35 // pred_region
        _
      $region52: #{gcnii_forward.4} parent=35 // pred_fallthru
        _
    $region36: #{gcnii_forward.4} parent=5 // pred_fallthru
      _
    %p776 = scmp.le.s32.totalorder 2, %s10
    // Predicated region
    $region53: #{gcnii_forward.4} parent=5 // pred_check
      %p777 = pneg %p776
    $region54: #{gcnii_forward.4} parent=5 // pred_check_branch
      %779 = sbr.rel (%p777) target = $region56
    $region55: #{gcnii_forward.4} parent=5 // pred_region
      %s780 = ssub.s32 %s10, 2
    $region56: #{gcnii_forward.4} parent=5 // pred_fallthru
      _
  $region6: #{gcnii_forward.4} parent=0 // loop_footer
    %s14 = sadd.s32 1, %s10
  $region7: #{gcnii_forward.4} parent=0 // loop_footer_branch
    %9 = sbr.rel target = $region3
  $region8: #{gcnii_forward.4} parent=0 // loop_exit
    _

</llo_original>
